<compile_context>
chip_gen: v7x
topology: tpu7x:2x2x1
jax: 0.10.0
libtpu: 0.0.40
codegen_flags: <defaults>
</compile_context>

<pallas_src>
import jax
import jax.numpy as jnp
import numpy as np
from jax import lax
from jax.experimental import pallas as pl
from jax.experimental.pallas import tpu as pltpu

# ---------------- synthetic hyper-parameters (stand in for FLAGS / env) ----------------
N_WORLD_OBS = 4      # env.n_world_obs
N_STATE_OBS = 6      # env.n_state_obs
HIDDEN = 32          # FLAGS.hidden_size  (chid2 == hid)
FILTER = 16          # FLAGS.filter_size  (chid1)
KWIN = 3             # FLAGS.conv_window
BATCH = 2
SPATIAL = 8          # W = H = D


# ---------------------------------- Pallas kernel ----------------------------------
def _world_featurizer_kernel(
    state_ref,    # (n_state, 1)   f32   state as a column
    patches_ref,  # (Kpad, WHD)    bf16  im2col matrix, contraction dim on sublanes
    w1_ref,       # (F1, Kpad)     bf16  conv1 weight (tap-major, channel-minor, zero-padded)
    b1_ref,       # (F1, 1)        f32
    w2_ref,       # (F2, F1)       f32   1x1x1 conv == channel matmul
    b2_ref,       # (F2, 1)        f32
    wm1_ref,      # (hid, n_state) f32
    bm1_ref,      # (hid, 1)       f32
    wm2_ref,      # (hid, hid)     f32
    bm2_ref,      # (hid, 1)       f32
    local_ref,    # out: (hid, 1)  f32
    wfeat_ref,    # out: (F2, WHD) f32   lane-dense, already NCDHW-major
):
  # ---- Conv3d(k, padding=k//2): one im2col matmul (bf16 operands, f32 accumulate) ----
  acc = jnp.dot(w1_ref[...], patches_ref[...],
                preferred_element_type=jnp.float32)                 # (F1, WHD)
  h1 = jnp.maximum(acc + b1_ref[...], 0.0)                          # ReLU, f32

  # ---- Conv3d(1): channel matmul, F2-major output -> unmasked full-lane stores ----
  wf = jnp.dot(w2_ref[...].astype(jnp.bfloat16), h1.astype(jnp.bfloat16),
               preferred_element_type=jnp.float32) + b2_ref[...]    # (F2, WHD)
  wfeat_ref[...] = wf.astype(wfeat_ref.dtype)

  # ---- global mean pool: mean commutes with the 1x1x1 conv, reduce F1-wide h1 ----
  inv_whd = 1.0 / wf.shape[-1]
  pool_h1 = jnp.sum(h1, axis=1, keepdims=True) * inv_whd            # (F1, 1)
  pool = jnp.dot(w2_ref[...], pool_h1,
                 preferred_element_type=jnp.float32) + b2_ref[...]  # (F2, 1)

  # ---- state MLP (column-oriented, f32): Linear -> ReLU -> Linear ----
  s = state_ref[...]                                                # (n_state, 1)
  m1 = jnp.maximum(
      jnp.dot(wm1_ref[...], s, preferred_element_type=jnp.float32) + bm1_ref[...], 0.0)
  m2 = jnp.dot(wm2_ref[...], m1, preferred_element_type=jnp.float32) + bm2_ref[...]

  local_ref[...] = (m2 + pool).astype(local_ref.dtype)              # (hid, 1)


# ---------------------------------- wrapper ----------------------------------
def world_featurizer_forward(init_obs, obs, torch_params, *, conv_window=KWIN):
  """Mirrors WorldFeaturizer.forward. Returns (local_feats, world_feats[NCDHW])."""
  _init_state_obs, init_world_obs = init_obs     # init_state_obs unused, as in PyTorch
  state_obs, world_obs = obs

  B, C, W, H, D = world_obs.shape
  K = conv_window
  p = K // 2
  WHD = W * H * D
  Cin = 2 * C

  w1, b1 = torch_params['w1'], torch_params['b1']       # (F1, Cin, K, K, K), (F1,)
  w2, b2 = torch_params['w2'], torch_params['b2']       # (F2, F1), (F2,)
  wm1, bm1 = torch_params['wm1'], torch_params['bm1']   # (hid, n_state), (hid,)
  wm2, bm2 = torch_params['wm2'], torch_params['bm2']   # (hid, hid), (hid,)
  F1, F2 = w1.shape[0], w2.shape[0]
  hid = wm2.shape[0]
  n_state = state_obs.shape[-1]

  # channel-concat (NCDHW dim=1) done channels-last, then zero spatial padding
  wo = jnp.transpose(world_obs, (0, 2, 3, 4, 1)).astype(jnp.float32)        # (B,W,H,D,C)
  iwo = jnp.transpose(init_world_obs, (0, 2, 3, 4, 1)).astype(jnp.float32)
  x = jnp.concatenate([wo, wo - iwo], axis=-1)                              # (B,W,H,D,2C)
  xpad = jnp.pad(x, ((0, 0), (p, p), (p, p), (p, p), (0, 0)))

  # im2col: (B, K^3*Cin, W*H*D), contraction ordered (tap-major, channel-minor),
  # zero-padded to a lane/MXU-friendly multiple of 128 (216 -> 256 here).
  taps = []
  for kw in range(K):
    for kh in range(K):
      for kd in range(K):
        taps.append(lax.slice(xpad, (0, kw, kh, kd, 0),
                              (B, kw + W, kh + H, kd + D, Cin)))
  patches = jnp.stack(taps, axis=1)                      # (B, K^3, W, H, D, Cin)
  patches = jnp.transpose(patches, (0, 1, 5, 2, 3, 4))   # (B, K^3, Cin, W, H, D)
  Kc = K * K * K * Cin
  patches = patches.reshape(B, Kc, WHD)
  Kpad = max(128, ((Kc + 127) // 128) * 128)
  patches = jnp.pad(patches, ((0, 0), (0, Kpad - Kc), (0, 0))).astype(jnp.bfloat16)

  # conv1 weight flattened to (F1, Kpad) in the same (tap, channel) order, bf16
  w1_mat = jnp.transpose(w1, (0, 2, 3, 4, 1)).reshape(F1, Kc)
  w1_mat = jnp.pad(w1_mat, ((0, 0), (0, Kpad - Kc))).astype(jnp.bfloat16)

  state_col = state_obs.astype(jnp.float32)[..., None]   # (B, n_state, 1)
  b1c = b1.reshape(F1, 1).astype(jnp.float32)
  b2c = b2.reshape(F2, 1).astype(jnp.float32)
  bm1c = bm1.reshape(hid, 1).astype(jnp.float32)
  bm2c = bm2.reshape(hid, 1).astype(jnp.float32)

  in_specs = [
      pl.BlockSpec((None, n_state, 1), lambda b: (b, 0, 0)),
      pl.BlockSpec((None, Kpad, WHD), lambda b: (b, 0, 0)),
      pl.BlockSpec((F1, Kpad), lambda b: (0, 0)),
      pl.BlockSpec((F1, 1), lambda b: (0, 0)),
      pl.BlockSpec((F2, F1), lambda b: (0, 0)),
      pl.BlockSpec((F2, 1), lambda b: (0, 0)),
      pl.BlockSpec((hid, n_state), lambda b: (0, 0)),
      pl.BlockSpec((hid, 1), lambda b: (0, 0)),
      pl.BlockSpec((hid, hid), lambda b: (0, 0)),
      pl.BlockSpec((hid, 1), lambda b: (0, 0)),
  ]
  out_specs = [
      pl.BlockSpec((None, hid, 1), lambda b: (b, 0, 0)),
      pl.BlockSpec((None, F2, WHD), lambda b: (b, 0, 0)),
  ]
  out_shape = [
      jax.ShapeDtypeStruct((B, hid, 1), jnp.float32),
      jax.ShapeDtypeStruct((B, F2, WHD), jnp.float32),
  ]

  local_col, wfeat_t = pl.pallas_call(
      _world_featurizer_kernel,
      out_shape=out_shape,
      grid=(B,),
      in_specs=in_specs,
      out_specs=out_specs,
      compiler_params=pltpu.CompilerParams(dimension_semantics=("parallel",)),
  )(state_col, patches, w1_mat, b1c,
    w2.astype(jnp.float32), b2c,
    wm1.astype(jnp.float32), bm1c,
    wm2.astype(jnp.float32), bm2c)

  local_feats = local_col[:, :, 0]                    # (B, hid)
  world_feats = wfeat_t.reshape(B, F2, W, H, D)       # already NCDHW-major, no transpose
  return local_feats, world_feats


# ---------------------------------- reference (plain JAX / XLA) ----------------------------------
def reference_forward(init_obs, obs, torch_params, K):
  _init_state, init_world = init_obs
  state, world = obs
  p = K // 2
  x = jnp.concatenate([world, world - init_world], axis=1)                 # (B, 2C, W, H, D)
  y = lax.conv_general_dilated(
      x, torch_params['w1'], window_strides=(1, 1, 1),
      padding=[(p, p)] * 3,
      dimension_numbers=('NCDHW', 'OIDHW', 'NCDHW'),
      precision=lax.Precision.HIGHEST)
  y = y + torch_params['b1'][None, :, None, None, None]
  y = jnp.maximum(y, 0.0)
  wf = jnp.einsum('bcxyz,oc->boxyz', y, torch_params['w2'],
                  precision=lax.Precision.HIGHEST)
  wf = wf + torch_params['b2'][None, :, None, None, None]
  sf = jnp.maximum(state @ torch_params['wm1'].T + torch_params['bm1'], 0.0)
  sf = sf @ torch_params['wm2'].T + torch_params['bm2']
  B, F2 = wf.shape[0], wf.shape[1]
  pool = wf.reshape(B, F2, -1).mean(axis=2)
  return sf + pool, wf


# ---------------------------------- main ----------------------------------
if __name__ == "__main__":
  key = jax.random.PRNGKey(0)
  ks = jax.random.split(key, 16)

  B, C, S = BATCH, N_WORLD_OBS, SPATIAL
  Cin = 2 * C

  # deterministic synthetic parameters (PyTorch-convention shapes)
  torch_params = {
      'w1': 0.1 * jax.random.normal(ks[0], (FILTER, Cin, KWIN, KWIN, KWIN), jnp.float32),
      'b1': 0.1 * jax.random.normal(ks[1], (FILTER,), jnp.float32),
      'w2': 0.1 * jax.random.normal(ks[2], (HIDDEN, FILTER), jnp.float32),   # 1x1x1 conv
      'b2': 0.1 * jax.random.normal(ks[3], (HIDDEN,), jnp.float32),
      'wm1': 0.1 * jax.random.normal(ks[4], (HIDDEN, N_STATE_OBS), jnp.float32),
      'bm1': 0.1 * jax.random.normal(ks[5], (HIDDEN,), jnp.float32),
      'wm2': 0.1 * jax.random.normal(ks[6], (HIDDEN, HIDDEN), jnp.float32),
      'bm2': 0.1 * jax.random.normal(ks[7], (HIDDEN,), jnp.float32),
  }

  # deterministic inputs (PyTorch NCDHW for world obs)
  init_state_obs = jax.random.normal(ks[8], (B, N_STATE_OBS), jnp.float32)
  init_world_obs = jax.random.normal(ks[9], (B, C, S, S, S), jnp.float32)
  state_obs = jax.random.normal(ks[10], (B, N_STATE_OBS), jnp.float32)
  world_obs = jax.random.normal(ks[11], (B, C, S, S, S), jnp.float32)

  init_obs = (init_state_obs, init_world_obs)
  obs = (state_obs, world_obs)

  local_feats, world_feats = world_featurizer_forward(init_obs, obs, torch_params)
  local_feats = jax.block_until_ready(local_feats)
  world_feats = jax.block_until_ready(world_feats)

  # correctness check against plain-JAX reference (bf16 MXU operands, f32 accumulation)
  local_ref, world_ref = reference_forward(init_obs, obs, torch_params, KWIN)
  np.testing.assert_allclose(np.asarray(world_feats), np.asarray(world_ref),
                             rtol=2e-2, atol=2e-2)
  np.testing.assert_allclose(np.asarray(local_feats), np.asarray(local_ref),
                             rtol=2e-2, atol=2e-2)
  assert local_feats.shape == (B, HIDDEN)
  assert world_feats.shape == (B, HIDDEN, S, S, S)

  print("KERNEL_OK")
</pallas_src>

<mosaic_0001>
module attributes {stable_mosaic.version = 11 : i64} {
  func.func @_world_featurizer_kernel(%arg0: i32, %arg1: memref<1x6x1xf32, #tpu.memory_space<vmem>>, %arg2: memref<1x256x512xbf16, #tpu.memory_space<vmem>>, %arg3: memref<16x256xbf16, #tpu.memory_space<vmem>>, %arg4: memref<16x1xf32, #tpu.memory_space<vmem>>, %arg5: memref<32x16xf32, #tpu.memory_space<vmem>>, %arg6: memref<32x1xf32, #tpu.memory_space<vmem>>, %arg7: memref<32x6xf32, #tpu.memory_space<vmem>>, %arg8: memref<32x1xf32, #tpu.memory_space<vmem>>, %arg9: memref<32x32xf32, #tpu.memory_space<vmem>>, %arg10: memref<32x1xf32, #tpu.memory_space<vmem>>, %arg11: memref<1x32x1xf32, #tpu.memory_space<vmem>>, %arg12: memref<1x32x512xf32, #tpu.memory_space<vmem>>) attributes {dimension_semantics = [#tpu.dimension_semantics<parallel>], iteration_bounds = array<i64: 2>, scalar_prefetch = 0 : i64, scratch_operands = 0 : i64, tpu.core_type = #tpu.core_type<tc>, window_params = [{transform_indices = @transform_0, window_bounds = array<i64: 1, 6, 1>}, {transform_indices = @transform_1, window_bounds = array<i64: 1, 256, 512>}, {pipeline_mode = #tpu.pipeline_mode<synchronous>, transform_indices = @transform_2, window_bounds = array<i64: 16, 256>}, {pipeline_mode = #tpu.pipeline_mode<synchronous>, transform_indices = @transform_3, window_bounds = array<i64: 16, 1>}, {pipeline_mode = #tpu.pipeline_mode<synchronous>, transform_indices = @transform_4, window_bounds = array<i64: 32, 16>}, {pipeline_mode = #tpu.pipeline_mode<synchronous>, transform_indices = @transform_5, window_bounds = array<i64: 32, 1>}, {pipeline_mode = #tpu.pipeline_mode<synchronous>, transform_indices = @transform_6, window_bounds = array<i64: 32, 6>}, {pipeline_mode = #tpu.pipeline_mode<synchronous>, transform_indices = @transform_7, window_bounds = array<i64: 32, 1>}, {pipeline_mode = #tpu.pipeline_mode<synchronous>, transform_indices = @transform_8, window_bounds = array<i64: 32, 32>}, {pipeline_mode = #tpu.pipeline_mode<synchronous>, transform_indices = @transform_9, window_bounds = array<i64: 32, 1>}, {transform_indices = @transform_10, window_bounds = array<i64: 1, 32, 1>}, {transform_indices = @transform_11, window_bounds = array<i64: 1, 32, 512>}]} {
    %c0 = arith.constant 0 : index
    %c0_0 = arith.constant 0 : index
    %0 = vector.load %arg3[%c0, %c0_0] : memref<16x256xbf16, #tpu.memory_space<vmem>>, vector<16x256xbf16>
    %c0_1 = arith.constant 0 : index
    %c0_2 = arith.constant 0 : index
    %c0_3 = arith.constant 0 : index
    %1 = vector.load %arg2[%c0_1, %c0_2, %c0_3] : memref<1x256x512xbf16, #tpu.memory_space<vmem>>, vector<1x256x512xbf16>
    %2 = vector.shape_cast %1 : vector<1x256x512xbf16> to vector<256x512xbf16>
    %cst = arith.constant dense<0.000000e+00> : vector<16x512xf32>
    %3 = tpu.matmul %0, %2, %cst {dimension_numbers = #tpu.dot_dimension_numbers<[1], [0], [0], [1], [0, 0, 1, 1], [], []>} : vector<16x256xbf16>, vector<256x512xbf16>, vector<16x512xf32> -> vector<16x512xf32>
    %c0_4 = arith.constant 0 : index
    %c0_5 = arith.constant 0 : index
    %4 = vector.load %arg4[%c0_4, %c0_5] : memref<16x1xf32, #tpu.memory_space<vmem>>, vector<16x1xf32>
    %5 = vector.broadcast %4 : vector<16x1xf32> to vector<16x512xf32>
    %6 = arith.addf %3, %5 : vector<16x512xf32>
    %cst_6 = arith.constant 0.000000e+00 : f32
    %7 = vector.broadcast %cst_6 : f32 to vector<16x512xf32>
    %8 = arith.maximumf %6, %7 : vector<16x512xf32>
    %c0_7 = arith.constant 0 : index
    %c0_8 = arith.constant 0 : index
    %9 = vector.load %arg5[%c0_7, %c0_8] : memref<32x16xf32, #tpu.memory_space<vmem>>, vector<32x16xf32>
    %10 = arith.truncf %9 : vector<32x16xf32> to vector<32x16xbf16>
    %11 = arith.truncf %8 : vector<16x512xf32> to vector<16x512xbf16>
    %cst_9 = arith.constant dense<0.000000e+00> : vector<32x512xf32>
    %12 = tpu.matmul %10, %11, %cst_9 {dimension_numbers = #tpu.dot_dimension_numbers<[1], [0], [0], [1], [0, 0, 1, 1], [], []>} : vector<32x16xbf16>, vector<16x512xbf16>, vector<32x512xf32> -> vector<32x512xf32>
    %c0_10 = arith.constant 0 : index
    %c0_11 = arith.constant 0 : index
    %13 = vector.load %arg6[%c0_10, %c0_11] : memref<32x1xf32, #tpu.memory_space<vmem>>, vector<32x1xf32>
    %14 = vector.broadcast %13 : vector<32x1xf32> to vector<32x512xf32>
    %15 = arith.addf %12, %14 : vector<32x512xf32>
    %c0_12 = arith.constant 0 : index
    %c0_13 = arith.constant 0 : index
    %c0_14 = arith.constant 0 : index
    %16 = vector.load %arg12[%c0_12, %c0_13, %c0_14] : memref<1x32x512xf32, #tpu.memory_space<vmem>>, vector<1x32x512xf32>
    %17 = vector.shape_cast %16 : vector<1x32x512xf32> to vector<32x512xf32>
    %18 = vector.shape_cast %15 : vector<32x512xf32> to vector<1x32x512xf32>
    tpu.vector_store %arg12[%c0_12, %c0_13, %c0_14], %18 {strides = array<i32>} : memref<1x32x512xf32, #tpu.memory_space<vmem>>, vector<1x32x512xf32>,
    %cst_15 = arith.constant dense<0.000000e+00> : vector<16xf32>
    %19 = vector.multi_reduction <add>, %8, %cst_15 [1] : vector<16x512xf32> to vector<16xf32>
    %20 = vector.shape_cast %19 : vector<16xf32> to vector<16x1xf32>
    %cst_16 = arith.constant 0.001953125 : f32
    %21 = vector.broadcast %cst_16 : f32 to vector<16x1xf32>
    %22 = arith.mulf %20, %21 : vector<16x1xf32>
    %c0_17 = arith.constant 0 : index
    %c0_18 = arith.constant 0 : index
    %23 = vector.load %arg5[%c0_17, %c0_18] : memref<32x16xf32, #tpu.memory_space<vmem>>, vector<32x16xf32>
    %cst_19 = arith.constant dense<0.000000e+00> : vector<32x1xf32>
    %24 = tpu.matmul %23, %22, %cst_19 {dimension_numbers = #tpu.dot_dimension_numbers<[1], [0], [0], [1], [0, 0, 1, 1], [], []>} : vector<32x16xf32>, vector<16x1xf32>, vector<32x1xf32> -> vector<32x1xf32>
    %c0_20 = arith.constant 0 : index
    %c0_21 = arith.constant 0 : index
    %25 = vector.load %arg6[%c0_20, %c0_21] : memref<32x1xf32, #tpu.memory_space<vmem>>, vector<32x1xf32>
    %26 = arith.addf %24, %25 : vector<32x1xf32>
    %c0_22 = arith.constant 0 : index
    %c0_23 = arith.constant 0 : index
    %c0_24 = arith.constant 0 : index
    %27 = vector.load %arg1[%c0_22, %c0_23, %c0_24] : memref<1x6x1xf32, #tpu.memory_space<vmem>>, vector<1x6x1xf32>
    %28 = vector.shape_cast %27 : vector<1x6x1xf32> to vector<6x1xf32>
    %c0_25 = arith.constant 0 : index
    %c0_26 = arith.constant 0 : index
    %29 = vector.load %arg7[%c0_25, %c0_26] : memref<32x6xf32, #tpu.memory_space<vmem>>, vector<32x6xf32>
    %cst_27 = arith.constant dense<0.000000e+00> : vector<32x1xf32>
    %30 = tpu.matmul %29, %28, %cst_27 {dimension_numbers = #tpu.dot_dimension_numbers<[1], [0], [0], [1], [0, 0, 1, 1], [], []>} : vector<32x6xf32>, vector<6x1xf32>, vector<32x1xf32> -> vector<32x1xf32>
    %c0_28 = arith.constant 0 : index
    %c0_29 = arith.constant 0 : index
    %31 = vector.load %arg8[%c0_28, %c0_29] : memref<32x1xf32, #tpu.memory_space<vmem>>, vector<32x1xf32>
    %32 = arith.addf %30, %31 : vector<32x1xf32>
    %cst_30 = arith.constant 0.000000e+00 : f32
    %33 = vector.broadcast %cst_30 : f32 to vector<32x1xf32>
    %34 = arith.maximumf %32, %33 : vector<32x1xf32>
    %c0_31 = arith.constant 0 : index
    %c0_32 = arith.constant 0 : index
    %35 = vector.load %arg9[%c0_31, %c0_32] : memref<32x32xf32, #tpu.memory_space<vmem>>, vector<32x32xf32>
    %cst_33 = arith.constant dense<0.000000e+00> : vector<32x1xf32>
    %36 = tpu.matmul %35, %34, %cst_33 {dimension_numbers = #tpu.dot_dimension_numbers<[1], [0], [0], [1], [0, 0, 1, 1], [], []>} : vector<32x32xf32>, vector<32x1xf32>, vector<32x1xf32> -> vector<32x1xf32>
    %c0_34 = arith.constant 0 : index
    %c0_35 = arith.constant 0 : index
    %37 = vector.load %arg10[%c0_34, %c0_35] : memref<32x1xf32, #tpu.memory_space<vmem>>, vector<32x1xf32>
    %38 = arith.addf %36, %37 : vector<32x1xf32>
    %39 = arith.addf %38, %26 : vector<32x1xf32>
    %c0_36 = arith.constant 0 : index
    %c0_37 = arith.constant 0 : index
    %c0_38 = arith.constant 0 : index
    %40 = vector.load %arg11[%c0_36, %c0_37, %c0_38] : memref<1x32x1xf32, #tpu.memory_space<vmem>>, vector<1x32x1xf32>
    %41 = vector.shape_cast %40 : vector<1x32x1xf32> to vector<32x1xf32>
    %42 = vector.shape_cast %39 : vector<32x1xf32> to vector<1x32x1xf32>
    tpu.vector_store %arg11[%c0_36, %c0_37, %c0_38], %42 {strides = array<i32>} : memref<1x32x1xf32, #tpu.memory_space<vmem>>, vector<1x32x1xf32>,
    return
  }
  func.func @transform_0(%arg0: i32) -> (i32, i32, i32) {
    %c0_i32 = arith.constant 0 : i32
    %c0_i32_0 = arith.constant 0 : i32
    %c0_i32_1 = arith.constant 0 : i32
    return %arg0, %c0_i32, %c0_i32_0 : i32, i32, i32
  }
  func.func @transform_1(%arg0: i32) -> (i32, i32, i32) {
    %c0_i32 = arith.constant 0 : i32
    %c0_i32_0 = arith.constant 0 : i32
    %c0_i32_1 = arith.constant 0 : i32
    return %arg0, %c0_i32, %c0_i32_0 : i32, i32, i32
  }
  func.func @transform_2(%arg0: i32) -> (i32, i32) {
    %c0_i32 = arith.constant 0 : i32
    %c0_i32_0 = arith.constant 0 : i32
    %c0_i32_1 = arith.constant 0 : i32
    return %c0_i32, %c0_i32_0 : i32, i32
  }
  func.func @transform_3(%arg0: i32) -> (i32, i32) {
    %c0_i32 = arith.constant 0 : i32
    %c0_i32_0 = arith.constant 0 : i32
    %c0_i32_1 = arith.constant 0 : i32
    return %c0_i32, %c0_i32_0 : i32, i32
  }
  func.func @transform_4(%arg0: i32) -> (i32, i32) {
    %c0_i32 = arith.constant 0 : i32
    %c0_i32_0 = arith.constant 0 : i32
    %c0_i32_1 = arith.constant 0 : i32
    return %c0_i32, %c0_i32_0 : i32, i32
  }
  func.func @transform_5(%arg0: i32) -> (i32, i32) {
    %c0_i32 = arith.constant 0 : i32
    %c0_i32_0 = arith.constant 0 : i32
    %c0_i32_1 = arith.constant 0 : i32
    return %c0_i32, %c0_i32_0 : i32, i32
  }
  func.func @transform_6(%arg0: i32) -> (i32, i32) {
    %c0_i32 = arith.constant 0 : i32
    %c0_i32_0 = arith.constant 0 : i32
    %c0_i32_1 = arith.constant 0 : i32
    return %c0_i32, %c0_i32_0 : i32, i32
  }
  func.func @transform_7(%arg0: i32) -> (i32, i32) {
    %c0_i32 = arith.constant 0 : i32
    %c0_i32_0 = arith.constant 0 : i32
    %c0_i32_1 = arith.constant 0 : i32
    return %c0_i32, %c0_i32_0 : i32, i32
  }
  func.func @transform_8(%arg0: i32) -> (i32, i32) {
    %c0_i32 = arith.constant 0 : i32
    %c0_i32_0 = arith.constant 0 : i32
    %c0_i32_1 = arith.constant 0 : i32
    return %c0_i32, %c0_i32_0 : i32, i32
  }
  func.func @transform_9(%arg0: i32) -> (i32, i32) {
    %c0_i32 = arith.constant 0 : i32
    %c0_i32_0 = arith.constant 0 : i32
    %c0_i32_1 = arith.constant 0 : i32
    return %c0_i32, %c0_i32_0 : i32, i32
  }
  func.func @transform_10(%arg0: i32) -> (i32, i32, i32) {
    %c0_i32 = arith.constant 0 : i32
    %c0_i32_0 = arith.constant 0 : i32
    %c0_i32_1 = arith.constant 0 : i32
    return %arg0, %c0_i32, %c0_i32_0 : i32, i32, i32
  }
  func.func @transform_11(%arg0: i32) -> (i32, i32, i32) {
    %c0_i32 = arith.constant 0 : i32
    %c0_i32_0 = arith.constant 0 : i32
    %c0_i32_1 = arith.constant 0 : i32
    return %arg0, %c0_i32, %c0_i32_0 : i32, i32, i32
  }
}

</mosaic_0001>

<llo_original>
// kernel: tpu_custom_call.1
$region0: #{tpu_custom_call.1}
  #allocation0 [shape = 'u32[]', space=smem, size = 0x4, offset = 0x4, fixed_abs, tag = 'smem constant byte address 0x4 - core index']
  #allocation1 [shape = 'u32[144,128]{1,0:T(1,128)}', space=vmem, size = 0x12000, scoped, tag = 'internal scratch']
  %s0 = inlined_call_operand.vmem [shape: f32[2,6,1], index: 0, kind: input, shape index: {}]
  %s1 = inlined_call_operand.hbm [shape: bf16[2,256,512], index: 1, kind: input, shape index: {}]
  %s2 = inlined_call_operand.vmem [shape: bf16[16,256], index: 2, kind: input, shape index: {}]
  %s3 = inlined_call_operand.vmem [shape: f32[16,1], index: 3, kind: input, shape index: {}]
  %s4 = inlined_call_operand.vmem [shape: f32[32,16], index: 4, kind: input, shape index: {}]
  %s5 = inlined_call_operand.vmem [shape: f32[32,1], index: 5, kind: input, shape index: {}]
  %s6 = inlined_call_operand.vmem [shape: f32[32,6], index: 6, kind: input, shape index: {}]
  %s7 = inlined_call_operand.vmem [shape: f32[32,1], index: 7, kind: input, shape index: {}]
  %s8 = inlined_call_operand.vmem [shape: f32[32,32], index: 8, kind: input, shape index: {}]
  %s9 = inlined_call_operand.vmem [shape: f32[32,1], index: 9, kind: input, shape index: {}]
  %s10 = inlined_call_operand.vmem [shape: f32[2,32,1], index: 10, kind: output, shape index: {0}]
  %s11 = inlined_call_operand.hbm [shape: f32[2,32,512], index: 11, kind: output, shape index: {1}]
  %12 = xla_tuple %s10, %s11
  %s13 = sld [smem:[#allocation0]]
  $region85: #{tpu_custom_call.1} parent=0
    _
  %s15 = ssub.s32 1, %s13
  %s16 = scalar_select 0, %s15, %s13
  $region1: #{tpu_custom_call.1} parent=0
    #allocation2 [shape = 'u8[524288]{0}', space=vmem, size = 0x80000, scoped, tag = 'input window, operand 1']
    #allocation3 [shape = 's32[2]{0}', space=sflag, size = 0x8, scoped, tag = 'scoped memory for tpu_custom_call.1']
    #allocation4 [shape = 's32[2]{0}', space=sflag, size = 0x8, scoped, tag = 'scoped memory for tpu_custom_call.1']
    #allocation5 [shape = 'u8[131072]{0}', space=vmem, size = 0x20000, scoped, tag = 'output window, operand 1']
    %17 = vsyncpa [#allocation3], 0
    %s18 = scalar_lea.sflag [#allocation3], 1
    %19 = vsyncpa %s18, 0
    %20 = vsyncpa [#allocation4], 0
    %s21 = scalar_lea.sflag [#allocation4], 1
    %22 = vsyncpa %s21, 0
    loop: start=0, step=1, limit=4
    $region2: #{tpu_custom_call.1} parent=1 // loop_pre_header
      _
    $region3: #{tpu_custom_call.1} parent=1 // loop_header
      %s24 = sphi 0, %s28
      %p25 = scmp.ge.s32.totalorder %s24, 4
      %s34 = sphi 0, %s36
      %s37 = sphi 0, %s34
      %s38 = sphi 0, %s37
      %s54 = sphi 0, %s38
      %s60 = sphi 0, %s62
      %s63 = sphi 0, %s60
      %s64 = sphi 0, %s63
      %s80 = sphi 0, %s64
      %s84 = sphi 0, %s84
      %s86 = sphi 0, %s84
      %s87 = sphi 0, %s86
      %s101 = sphi 0, %s87
      %s105 = sphi 0, %s105
      %s107 = sphi 0, %s105
      %s108 = sphi 0, %s107
      %s122 = sphi 0, %s108
      %s126 = sphi 0, %s126
      %s128 = sphi 0, %s126
      %s129 = sphi 0, %s128
      %s143 = sphi 0, %s129
      %s147 = sphi 0, %s147
      %s149 = sphi 0, %s147
      %s150 = sphi 0, %s149
      %s164 = sphi 0, %s150
      %s168 = sphi 0, %s168
      %s170 = sphi 0, %s168
      %s171 = sphi 0, %s170
      %s185 = sphi 0, %s171
      %s189 = sphi 0, %s189
      %s191 = sphi 0, %s189
      %s192 = sphi 0, %s191
      %s206 = sphi 0, %s192
      %s210 = sphi 0, %s210
      %s212 = sphi 0, %s210
      %s213 = sphi 0, %s212
      %s227 = sphi 0, %s213
      %s231 = sphi 0, %s231
      %s233 = sphi 0, %s231
      %s234 = sphi 0, %s233
      %s248 = sphi 0, %s234
      %s254 = sphi 0, %s256
      %s257 = sphi 0, %s254
      %s258 = sphi 0, %s257
      %s274 = sphi 0, %s258
      %s280 = sphi 0, %s282
      %s283 = sphi 0, %s280
      %s284 = sphi 0, %s283
      %s300 = sphi 0, %s284
    $region4: #{tpu_custom_call.1} parent=1 // loop_header_branch
      %27 = sbr.rel (%p25) target = $region8
    $region5: #{tpu_custom_call.1} parent=1 // loop_body
      %s29 = ssub.s32 %s24, 1
      %s30 = ssub.s32 %s24, 2
      %s31 = sadd.s32 %s24, 1
      %s32 = ssub.s32 %s24, %s31
      %p33 = scmp.eq.s32.totalorder %s32, 0
      %s35 = sadd.s32 %s34, 1
      %s36 = scalar_select %p33, %s34, %s35
      %p39 = pneg %p33
      %p40 = scmp.eq.s32.totalorder %s24, 1
      %p41 = por %p39, %p40
      %p42 = scmp.ne.s32.totalorder %s34, %s37
      %p43 = scmp.eq.s32.totalorder %s24, 0
      %p44 = por %p42, %p43
      %p45 = scmp.ne.s32.totalorder %s34, %s37
      %p46 = scmp.eq.s32.totalorder %s29, 1
      %p47 = por %p45, %p46
      %p48 = scmp.ne.s32.totalorder %s37, %s38
      %p49 = scmp.eq.s32.totalorder %s29, 0
      %p50 = por %p48, %p49
      %p51 = scmp.ne.s32.totalorder %s37, %s38
      %p52 = scmp.eq.s32.totalorder %s30, 1
      %p53 = por %p51, %p52
      %p55 = scmp.ne.s32.totalorder %s38, %s54
      %p56 = scmp.eq.s32.totalorder %s30, 0
      %p57 = por %p55, %p56
      %s58 = ssub.s32 %s24, %s31
      %p59 = scmp.eq.s32.totalorder %s58, 0
      %s61 = sadd.s32 %s60, 1
      %s62 = scalar_select %p59, %s60, %s61
      %p65 = pneg %p59
      %p66 = scmp.eq.s32.totalorder %s24, 1
      %p67 = por %p65, %p66
      %p68 = scmp.ne.s32.totalorder %s60, %s63
      %p69 = scmp.eq.s32.totalorder %s24, 0
      %p70 = por %p68, %p69
      %p71 = scmp.ne.s32.totalorder %s60, %s63
      %p72 = scmp.eq.s32.totalorder %s29, 1
      %p73 = por %p71, %p72
      %p74 = scmp.ne.s32.totalorder %s63, %s64
      %p75 = scmp.eq.s32.totalorder %s29, 0
      %p76 = por %p74, %p75
      %p77 = scmp.ne.s32.totalorder %s63, %s64
      %p78 = scmp.eq.s32.totalorder %s30, 1
      %p79 = por %p77, %p78
      %p81 = scmp.ne.s32.totalorder %s64, %s80
      %p82 = scmp.eq.s32.totalorder %s30, 0
      %p83 = por %p81, %p82
      %s85 = sadd.s32 %s84, 1
      %p88 = scmp.eq.s32.totalorder %s24, 1
      %p89 = scmp.ne.s32.totalorder %s84, %s86
      %p90 = scmp.eq.s32.totalorder %s24, 0
      %p91 = por %p89, %p90
      %p92 = scmp.ne.s32.totalorder %s84, %s86
      %p93 = scmp.eq.s32.totalorder %s29, 1
      %p94 = por %p92, %p93
      %p95 = scmp.ne.s32.totalorder %s86, %s87
      %p96 = scmp.eq.s32.totalorder %s29, 0
      %p97 = por %p95, %p96
      %p98 = scmp.ne.s32.totalorder %s86, %s87
      %p99 = scmp.eq.s32.totalorder %s30, 1
      %p100 = por %p98, %p99
      %p102 = scmp.ne.s32.totalorder %s87, %s101
      %p103 = scmp.eq.s32.totalorder %s30, 0
      %p104 = por %p102, %p103
      %s106 = sadd.s32 %s105, 1
      %p109 = scmp.eq.s32.totalorder %s24, 1
      %p110 = scmp.ne.s32.totalorder %s105, %s107
      %p111 = scmp.eq.s32.totalorder %s24, 0
      %p112 = por %p110, %p111
      %p113 = scmp.ne.s32.totalorder %s105, %s107
      %p114 = scmp.eq.s32.totalorder %s29, 1
      %p115 = por %p113, %p114
      %p116 = scmp.ne.s32.totalorder %s107, %s108
      %p117 = scmp.eq.s32.totalorder %s29, 0
      %p118 = por %p116, %p117
      %p119 = scmp.ne.s32.totalorder %s107, %s108
      %p120 = scmp.eq.s32.totalorder %s30, 1
      %p121 = por %p119, %p120
      %p123 = scmp.ne.s32.totalorder %s108, %s122
      %p124 = scmp.eq.s32.totalorder %s30, 0
      %p125 = por %p123, %p124
      %s127 = sadd.s32 %s126, 1
      %p130 = scmp.eq.s32.totalorder %s24, 1
      %p131 = scmp.ne.s32.totalorder %s126, %s128
      %p132 = scmp.eq.s32.totalorder %s24, 0
      %p133 = por %p131, %p132
      %p134 = scmp.ne.s32.totalorder %s126, %s128
      %p135 = scmp.eq.s32.totalorder %s29, 1
      %p136 = por %p134, %p135
      %p137 = scmp.ne.s32.totalorder %s128, %s129
      %p138 = scmp.eq.s32.totalorder %s29, 0
      %p139 = por %p137, %p138
      %p140 = scmp.ne.s32.totalorder %s128, %s129
      %p141 = scmp.eq.s32.totalorder %s30, 1
      %p142 = por %p140, %p141
      %p144 = scmp.ne.s32.totalorder %s129, %s143
      %p145 = scmp.eq.s32.totalorder %s30, 0
      %p146 = por %p144, %p145
      %s148 = sadd.s32 %s147, 1
      %p151 = scmp.eq.s32.totalorder %s24, 1
      %p152 = scmp.ne.s32.totalorder %s147, %s149
      %p153 = scmp.eq.s32.totalorder %s24, 0
      %p154 = por %p152, %p153
      %p155 = scmp.ne.s32.totalorder %s147, %s149
      %p156 = scmp.eq.s32.totalorder %s29, 1
      %p157 = por %p155, %p156
      %p158 = scmp.ne.s32.totalorder %s149, %s150
      %p159 = scmp.eq.s32.totalorder %s29, 0
      %p160 = por %p158, %p159
      %p161 = scmp.ne.s32.totalorder %s149, %s150
      %p162 = scmp.eq.s32.totalorder %s30, 1
      %p163 = por %p161, %p162
      %p165 = scmp.ne.s32.totalorder %s150, %s164
      %p166 = scmp.eq.s32.totalorder %s30, 0
      %p167 = por %p165, %p166
      %s169 = sadd.s32 %s168, 1
      %p172 = scmp.eq.s32.totalorder %s24, 1
      %p173 = scmp.ne.s32.totalorder %s168, %s170
      %p174 = scmp.eq.s32.totalorder %s24, 0
      %p175 = por %p173, %p174
      %p176 = scmp.ne.s32.totalorder %s168, %s170
      %p177 = scmp.eq.s32.totalorder %s29, 1
      %p178 = por %p176, %p177
      %p179 = scmp.ne.s32.totalorder %s170, %s171
      %p180 = scmp.eq.s32.totalorder %s29, 0
      %p181 = por %p179, %p180
      %p182 = scmp.ne.s32.totalorder %s170, %s171
      %p183 = scmp.eq.s32.totalorder %s30, 1
      %p184 = por %p182, %p183
      %p186 = scmp.ne.s32.totalorder %s171, %s185
      %p187 = scmp.eq.s32.totalorder %s30, 0
      %p188 = por %p186, %p187
      %s190 = sadd.s32 %s189, 1
      %p193 = scmp.eq.s32.totalorder %s24, 1
      %p194 = scmp.ne.s32.totalorder %s189, %s191
      %p195 = scmp.eq.s32.totalorder %s24, 0
      %p196 = por %p194, %p195
      %p197 = scmp.ne.s32.totalorder %s189, %s191
      %p198 = scmp.eq.s32.totalorder %s29, 1
      %p199 = por %p197, %p198
      %p200 = scmp.ne.s32.totalorder %s191, %s192
      %p201 = scmp.eq.s32.totalorder %s29, 0
      %p202 = por %p200, %p201
      %p203 = scmp.ne.s32.totalorder %s191, %s192
      %p204 = scmp.eq.s32.totalorder %s30, 1
      %p205 = por %p203, %p204
      %p207 = scmp.ne.s32.totalorder %s192, %s206
      %p208 = scmp.eq.s32.totalorder %s30, 0
      %p209 = por %p207, %p208
      %s211 = sadd.s32 %s210, 1
      %p214 = scmp.eq.s32.totalorder %s24, 1
      %p215 = scmp.ne.s32.totalorder %s210, %s212
      %p216 = scmp.eq.s32.totalorder %s24, 0
      %p217 = por %p215, %p216
      %p218 = scmp.ne.s32.totalorder %s210, %s212
      %p219 = scmp.eq.s32.totalorder %s29, 1
      %p220 = por %p218, %p219
      %p221 = scmp.ne.s32.totalorder %s212, %s213
      %p222 = scmp.eq.s32.totalorder %s29, 0
      %p223 = por %p221, %p222
      %p224 = scmp.ne.s32.totalorder %s212, %s213
      %p225 = scmp.eq.s32.totalorder %s30, 1
      %p226 = por %p224, %p225
      %p228 = scmp.ne.s32.totalorder %s213, %s227
      %p229 = scmp.eq.s32.totalorder %s30, 0
      %p230 = por %p228, %p229
      %s232 = sadd.s32 %s231, 1
      %p235 = scmp.eq.s32.totalorder %s24, 1
      %p236 = scmp.ne.s32.totalorder %s231, %s233
      %p237 = scmp.eq.s32.totalorder %s24, 0
      %p238 = por %p236, %p237
      %p239 = scmp.ne.s32.totalorder %s231, %s233
      %p240 = scmp.eq.s32.totalorder %s29, 1
      %p241 = por %p239, %p240
      %p242 = scmp.ne.s32.totalorder %s233, %s234
      %p243 = scmp.eq.s32.totalorder %s29, 0
      %p244 = por %p242, %p243
      %p245 = scmp.ne.s32.totalorder %s233, %s234
      %p246 = scmp.eq.s32.totalorder %s30, 1
      %p247 = por %p245, %p246
      %p249 = scmp.ne.s32.totalorder %s234, %s248
      %p250 = scmp.eq.s32.totalorder %s30, 0
      %p251 = por %p249, %p250
      %s252 = ssub.s32 %s24, %s31
      %p253 = scmp.eq.s32.totalorder %s252, 0
      %s255 = sadd.s32 %s254, 1
      %s256 = scalar_select %p253, %s254, %s255
      %p259 = pneg %p253
      %p260 = scmp.eq.s32.totalorder %s24, 1
      %p261 = por %p259, %p260
      %p262 = scmp.ne.s32.totalorder %s254, %s257
      %p263 = scmp.eq.s32.totalorder %s24, 0
      %p264 = por %p262, %p263
      %p265 = scmp.ne.s32.totalorder %s254, %s257
      %p266 = scmp.eq.s32.totalorder %s29, 1
      %p267 = por %p265, %p266
      %p268 = scmp.ne.s32.totalorder %s257, %s258
      %p269 = scmp.eq.s32.totalorder %s29, 0
      %p270 = por %p268, %p269
      %p271 = scmp.ne.s32.totalorder %s257, %s258
      %p272 = scmp.eq.s32.totalorder %s30, 1
      %p273 = por %p271, %p272
      %p275 = scmp.ne.s32.totalorder %s258, %s274
      %p276 = scmp.eq.s32.totalorder %s30, 0
      %p277 = por %p275, %p276
      %s278 = ssub.s32 %s24, %s31
      %p279 = scmp.eq.s32.totalorder %s278, 0
      %s281 = sadd.s32 %s280, 1
      %s282 = scalar_select %p279, %s280, %s281
      %p285 = pneg %p279
      %p286 = scmp.eq.s32.totalorder %s24, 1
      %p287 = por %p285, %p286
      %p288 = scmp.ne.s32.totalorder %s280, %s283
      %p289 = scmp.eq.s32.totalorder %s24, 0
      %p290 = por %p288, %p289
      %p291 = scmp.ne.s32.totalorder %s280, %s283
      %p292 = scmp.eq.s32.totalorder %s29, 1
      %p293 = por %p291, %p292
      %p294 = scmp.ne.s32.totalorder %s283, %s284
      %p295 = scmp.eq.s32.totalorder %s29, 0
      %p296 = por %p294, %p295
      %p297 = scmp.ne.s32.totalorder %s283, %s284
      %p298 = scmp.eq.s32.totalorder %s30, 1
      %p299 = por %p297, %p298
      %p301 = scmp.ne.s32.totalorder %s284, %s300
      %p302 = scmp.eq.s32.totalorder %s30, 0
      %p303 = por %p301, %p302
      %p304 = scmp.le.s32.totalorder 1, %s24
      %p305 = scmp.lt.s32.totalorder %s24, 3
      %p306 = pnand %p304, %p305
      %p307 = pneg %p306
      // Predicated region
      $region9: #{tpu_custom_call.1} parent=5 // pred_check
        _
      $region10: #{tpu_custom_call.1} parent=5 // pred_check_branch
        %309 = sbr.rel (%p306) target = $region12
      $region11: #{tpu_custom_call.1} parent=5 // pred_region
        %s310 = ssub.s32 %s24, 1
        // Predicated region
        $region13: #{tpu_custom_call.1} parent=11 // pred_check
          %p311 = pneg %p97
        $region14: #{tpu_custom_call.1} parent=11 // pred_check_branch
          %313 = sbr.rel (%p311) target = $region16
        $region15: #{tpu_custom_call.1} parent=11 // pred_region
          _
        $region16: #{tpu_custom_call.1} parent=11 // pred_fallthru
          _
        // Predicated region
        $region17: #{tpu_custom_call.1} parent=11 // pred_check
          %p314 = pneg %p118
        $region18: #{tpu_custom_call.1} parent=11 // pred_check_branch
          %316 = sbr.rel (%p314) target = $region20
        $region19: #{tpu_custom_call.1} parent=11 // pred_region
          _
        $region20: #{tpu_custom_call.1} parent=11 // pred_fallthru
          _
        // Predicated region
        $region21: #{tpu_custom_call.1} parent=11 // pred_check
          %p317 = pneg %p139
        $region22: #{tpu_custom_call.1} parent=11 // pred_check_branch
          %319 = sbr.rel (%p317) target = $region24
        $region23: #{tpu_custom_call.1} parent=11 // pred_region
          _
        $region24: #{tpu_custom_call.1} parent=11 // pred_fallthru
          _
        // Predicated region
        $region25: #{tpu_custom_call.1} parent=11 // pred_check
          %p320 = pneg %p160
        $region26: #{tpu_custom_call.1} parent=11 // pred_check_branch
          %322 = sbr.rel (%p320) target = $region28
        $region27: #{tpu_custom_call.1} parent=11 // pred_region
          _
        $region28: #{tpu_custom_call.1} parent=11 // pred_fallthru
          _
        // Predicated region
        $region29: #{tpu_custom_call.1} parent=11 // pred_check
          %p323 = pneg %p181
        $region30: #{tpu_custom_call.1} parent=11 // pred_check_branch
          %325 = sbr.rel (%p323) target = $region32
        $region31: #{tpu_custom_call.1} parent=11 // pred_region
          _
        $region32: #{tpu_custom_call.1} parent=11 // pred_fallthru
          _
        // Predicated region
        $region33: #{tpu_custom_call.1} parent=11 // pred_check
          %p326 = pneg %p202
        $region34: #{tpu_custom_call.1} parent=11 // pred_check_branch
          %328 = sbr.rel (%p326) target = $region36
        $region35: #{tpu_custom_call.1} parent=11 // pred_region
          _
        $region36: #{tpu_custom_call.1} parent=11 // pred_fallthru
          _
        // Predicated region
        $region37: #{tpu_custom_call.1} parent=11 // pred_check
          %p329 = pneg %p223
        $region38: #{tpu_custom_call.1} parent=11 // pred_check_branch
          %331 = sbr.rel (%p329) target = $region40
        $region39: #{tpu_custom_call.1} parent=11 // pred_region
          _
        $region40: #{tpu_custom_call.1} parent=11 // pred_fallthru
          _
        // Predicated region
        $region41: #{tpu_custom_call.1} parent=11 // pred_check
          %p332 = pneg %p244
        $region42: #{tpu_custom_call.1} parent=11 // pred_check_branch
          %334 = sbr.rel (%p332) target = $region44
        $region43: #{tpu_custom_call.1} parent=11 // pred_region
          _
        $region44: #{tpu_custom_call.1} parent=11 // pred_fallthru
          _
      $region12: #{tpu_custom_call.1} parent=5 // pred_fallthru
        _
      %p335 = scmp.lt.s32.totalorder %s24, 2
      // Predicated region
      $region45: #{tpu_custom_call.1} parent=5 // pred_check
        %p336 = pneg %p335
      $region46: #{tpu_custom_call.1} parent=5 // pred_check_branch
        %338 = sbr.rel (%p336) target = $region48
      $region47: #{tpu_custom_call.1} parent=5 // pred_region
        // Predicated region
        $region49: #{tpu_custom_call.1} parent=47 // pred_check
          %p339 = pneg %p44
        $region50: #{tpu_custom_call.1} parent=47 // pred_check_branch
          %341 = sbr.rel (%p339) target = $region52
        $region51: #{tpu_custom_call.1} parent=47 // pred_region
          %p342 = scmp.lt.s32.totalorder %s24, 1
          %s343 = scalar_select %p342, %s24, 1
          %s344 = smul.addr %s343, 8
          %s345 = scalar_lea.vmem %s0, %s344
        $region52: #{tpu_custom_call.1} parent=47 // pred_fallthru
          _
        // Predicated region
        $region53: #{tpu_custom_call.1} parent=47 // pred_check
          %p346 = pneg %p70
        $region54: #{tpu_custom_call.1} parent=47 // pred_check_branch
          %348 = sbr.rel (%p346) target = $region56
        $region55: #{tpu_custom_call.1} parent=47 // pred_region
          %s349 = sand.u32 %s60, 1
          %s350 = scalar_lea.sflag [#allocation3], %s349
          %s351 = sand.u32 %s60, 1
          %s352 = smul.addr %s351, 512
          %s353 = scalar_lea.vmem [#allocation2], %s352
          %s355 = ssub.s32 8192, 8192
          %356 = vsyncadd %s350, %s355
          %s357 = smul.addr %s24, 128
          %s358 = smul.addr %s357, 64
          %s359 = scalar_lea.hbm %s1, %s358
          %s360 = sshll.u32 %s353, 4
          %s361 = int_to_ptr.vmem [resolvable:$true] %s360
          %366 = dma.hbm_to_vmem [thread:$0]  %s359, 8192, %s361, %s350, 256, 256, 16
        $region56: #{tpu_custom_call.1} parent=47 // pred_fallthru
          _
      $region48: #{tpu_custom_call.1} parent=5 // pred_fallthru
        _
      %p367 = scmp.le.s32.totalorder 1, %s24
      %p368 = scmp.lt.s32.totalorder %s24, 3
      %p369 = pnand %p367, %p368
      %p370 = pneg %p369
      // Predicated region
      $region57: #{tpu_custom_call.1} parent=5 // pred_check
        _
      $region58: #{tpu_custom_call.1} parent=5 // pred_check_branch
        %372 = sbr.rel (%p369) target = $region60
      $region59: #{tpu_custom_call.1} parent=5 // pred_region
        %s373 = ssub.s32 %s24, 1
        %s374 = sand.u32 %s63, 1
        %s375 = scalar_lea.sflag [#allocation3], %s374
        %s376 = sand.u32 %s63, 1
        %s377 = smul.addr %s376, 512
        %s378 = scalar_lea.vmem [#allocation2], %s377
        // Predicated region
        $region61: #{tpu_custom_call.1} parent=59 // pred_check
          %p379 = pneg %p76
        $region62: #{tpu_custom_call.1} parent=59 // pred_check_branch
          %381 = sbr.rel (%p379) target = $region64
        $region63: #{tpu_custom_call.1} parent=59 // pred_region
          %382 = dma.done %s375, 8192
        $region64: #{tpu_custom_call.1} parent=59 // pred_fallthru
          _
        %p383 = scmp.lt.s32.totalorder %s29, 1
        %s384 = scalar_select %p383, %s29, 1
        %s385 = smul.addr %s384, 8
        %s386 = scalar_lea.vmem %s0, %s385
        %p387 = pneg %p50
        %p388 = pneg %p47
        %s389 = sand.u32 %s63, 1
        %s390 = scalar_lea.sflag [#allocation3], %s389
        %s391 = sand.u32 %s63, 1
        %s392 = smul.addr %s391, 512
        %s393 = scalar_lea.vmem [#allocation2], %s392
        %p394 = pneg %p76
        %p395 = pneg %p73
        %p396 = pneg %p97
        %p397 = pneg %p94
        %p398 = pneg %p118
        %p399 = pneg %p115
        %p400 = pneg %p139
        %p401 = pneg %p136
        %p402 = pneg %p160
        %p403 = pneg %p157
        %p404 = pneg %p181
        %p405 = pneg %p178
        %p406 = pneg %p202
        %p407 = pneg %p199
        %p408 = pneg %p223
        %p409 = pneg %p220
        %p410 = pneg %p244
        %p411 = pneg %p241
        %p412 = pneg %p270
        %p413 = pneg %p267
        %p414 = scmp.lt.s32.totalorder %s29, 1
        %s415 = scalar_select %p414, %s29, 1
        %s416 = smul.addr %s415, 4
        %s417 = smul.addr %s416, 8
        %s418 = scalar_lea.vmem %s10, %s417
        %p419 = pneg %p296
        %p420 = pneg %p293
        %s421 = sand.u32 %s283, 1
        %s422 = scalar_lea.sflag [#allocation4], %s421
        %s423 = sand.u32 %s283, 1
        %s424 = smul.addr %s423, 128
        %s425 = scalar_lea.vmem [#allocation5], %s424
        %p426 = scmp.lt.s32.totalorder %s29, 1
        %s427 = scalar_select %p426, %s29, 1
        %s428 = smul.addr %s427, 8
        %s429 = scalar_lea.vmem %s0, %s428
        %p430 = scmp.lt.s32.totalorder %s29, 1
        %s431 = scalar_select %p430, %s29, 1
        %s432 = smul.addr %s431, 4
        %s433 = smul.addr %s432, 8
        %s434 = scalar_lea.vmem %s10, %s433
        %v436 = vld [vmem:[%s2] sm:$0xff]
        %v437 = vld [vmem:[%s2 + $0x8] sm:$0xff]
        %v438 = vld [vmem:[%s378] sm:$0xff]
        %v439 = vld [vmem:[%s378 + $0x8] sm:$0xff]
        %v440 = vld [vmem:[%s378 + $0x10] sm:$0xff]
        %v441 = vld [vmem:[%s378 + $0x18] sm:$0xff]
        %v442 = vld [vmem:[%s378 + $0x20] sm:$0xff]
        %v443 = vld [vmem:[%s378 + $0x28] sm:$0xff]
        %v444 = vld [vmem:[%s378 + $0x30] sm:$0xff]
        %v445 = vld [vmem:[%s378 + $0x38] sm:$0xff]
        %v446 = vld [vmem:[%s378 + $0x40] sm:$0xff]
        %v447 = vld [vmem:[%s378 + $0x48] sm:$0xff]
        %v448 = vld [vmem:[%s378 + $0x50] sm:$0xff]
        %v449 = vld [vmem:[%s378 + $0x58] sm:$0xff]
        %v450 = vld [vmem:[%s378 + $0x60] sm:$0xff]
        %v451 = vld [vmem:[%s378 + $0x68] sm:$0xff]
        %v452 = vld [vmem:[%s378 + $0x70] sm:$0xff]
        %v453 = vld [vmem:[%s378 + $0x78] sm:$0xff]
        %v454 = vld [vmem:[%s378 + $0x80] sm:$0xff]
        %v455 = vld [vmem:[%s378 + $0x88] sm:$0xff]
        %v456 = vld [vmem:[%s378 + $0x90] sm:$0xff]
        %v457 = vld [vmem:[%s378 + $0x98] sm:$0xff]
        %v458 = vld [vmem:[%s378 + $0xa0] sm:$0xff]
        %v459 = vld [vmem:[%s378 + $0xa8] sm:$0xff]
        %v460 = vld [vmem:[%s378 + $0xb0] sm:$0xff]
        %v461 = vld [vmem:[%s378 + $0xb8] sm:$0xff]
        %v462 = vld [vmem:[%s378 + $0xc0] sm:$0xff]
        %v463 = vld [vmem:[%s378 + $0xc8] sm:$0xff]
        %v464 = vld [vmem:[%s378 + $0xd0] sm:$0xff]
        %v465 = vld [vmem:[%s378 + $0xd8] sm:$0xff]
        %v466 = vld [vmem:[%s378 + $0xe0] sm:$0xff]
        %v467 = vld [vmem:[%s378 + $0xe8] sm:$0xff]
        %v468 = vld [vmem:[%s378 + $0xf0] sm:$0xff]
        %v469 = vld [vmem:[%s378 + $0xf8] sm:$0xff]
        %v470 = vld [vmem:[%s378 + $0x100] sm:$0xff]
        %v471 = vld [vmem:[%s378 + $0x108] sm:$0xff]
        %v472 = vld [vmem:[%s378 + $0x110] sm:$0xff]
        %v473 = vld [vmem:[%s378 + $0x118] sm:$0xff]
        %v474 = vld [vmem:[%s378 + $0x120] sm:$0xff]
        %v475 = vld [vmem:[%s378 + $0x128] sm:$0xff]
        %v476 = vld [vmem:[%s378 + $0x130] sm:$0xff]
        %v477 = vld [vmem:[%s378 + $0x138] sm:$0xff]
        %v478 = vld [vmem:[%s378 + $0x140] sm:$0xff]
        %v479 = vld [vmem:[%s378 + $0x148] sm:$0xff]
        %v480 = vld [vmem:[%s378 + $0x150] sm:$0xff]
        %v481 = vld [vmem:[%s378 + $0x158] sm:$0xff]
        %v482 = vld [vmem:[%s378 + $0x160] sm:$0xff]
        %v483 = vld [vmem:[%s378 + $0x168] sm:$0xff]
        %v484 = vld [vmem:[%s378 + $0x170] sm:$0xff]
        %v485 = vld [vmem:[%s378 + $0x178] sm:$0xff]
        %v486 = vld [vmem:[%s378 + $0x180] sm:$0xff]
        %v487 = vld [vmem:[%s378 + $0x188] sm:$0xff]
        %v488 = vld [vmem:[%s378 + $0x190] sm:$0xff]
        %v489 = vld [vmem:[%s378 + $0x198] sm:$0xff]
        %v490 = vld [vmem:[%s378 + $0x1a0] sm:$0xff]
        %v491 = vld [vmem:[%s378 + $0x1a8] sm:$0xff]
        %v492 = vld [vmem:[%s378 + $0x1b0] sm:$0xff]
        %v493 = vld [vmem:[%s378 + $0x1b8] sm:$0xff]
        %v494 = vld [vmem:[%s378 + $0x1c0] sm:$0xff]
        %v495 = vld [vmem:[%s378 + $0x1c8] sm:$0xff]
        %v496 = vld [vmem:[%s378 + $0x1d0] sm:$0xff]
        %v497 = vld [vmem:[%s378 + $0x1d8] sm:$0xff]
        %v498 = vld [vmem:[%s378 + $0x1e0] sm:$0xff]
        %v499 = vld [vmem:[%s378 + $0x1e8] sm:$0xff]
        %v500 = vld [vmem:[%s378 + $0x1f0] sm:$0xff]
        %v501 = vld [vmem:[%s378 + $0x1f8] sm:$0xff]
        %v502 = vld [vmem:[%s3] sm:$0xff]
        %v503 = vld [vmem:[%s3 + $0x8] sm:$0xff]
        %505 = vset.pattern.permute.xlu0 0
        %506 = vperm.xlu0 %505, %v502
        %v507 = vpop.permute.xlu0 %506
        %510 = vset.pattern.permute.xlu0 0
        %511 = vperm.xlu0 %510, %v503
        %v512 = vpop.permute.xlu0 %511
        %v516 = vunpack.c.l.b16 %v436
        %v517 = vunpack.c.h.b16 %v436
        %v518 = vunpack.c.l.b16 %v437
        %v519 = vunpack.c.h.b16 %v437
        %v520 = vpack.c.b16 %v518, %v516
        %v521 = vpack.c.b16 %v519, %v517
        %v588 = vunpack.c.l.b16 %v438
        %v589 = vunpack.c.h.b16 %v438
        %v590 = vunpack.c.l.b16 %v439
        %v591 = vunpack.c.h.b16 %v439
        %v592 = vunpack.c.l.b16 %v440
        %v593 = vunpack.c.h.b16 %v440
        %v594 = vunpack.c.l.b16 %v441
        %v595 = vunpack.c.h.b16 %v441
        %v596 = vunpack.c.l.b16 %v442
        %v597 = vunpack.c.h.b16 %v442
        %v598 = vunpack.c.l.b16 %v443
        %v599 = vunpack.c.h.b16 %v443
        %v600 = vunpack.c.l.b16 %v444
        %v601 = vunpack.c.h.b16 %v444
        %v602 = vunpack.c.l.b16 %v445
        %v603 = vunpack.c.h.b16 %v445
        %v604 = vunpack.c.l.b16 %v446
        %v605 = vunpack.c.h.b16 %v446
        %v606 = vunpack.c.l.b16 %v447
        %v607 = vunpack.c.h.b16 %v447
        %v608 = vunpack.c.l.b16 %v448
        %v609 = vunpack.c.h.b16 %v448
        %v610 = vunpack.c.l.b16 %v449
        %v611 = vunpack.c.h.b16 %v449
        %v612 = vunpack.c.l.b16 %v450
        %v613 = vunpack.c.h.b16 %v450
        %v614 = vunpack.c.l.b16 %v451
        %v615 = vunpack.c.h.b16 %v451
        %v616 = vunpack.c.l.b16 %v452
        %v617 = vunpack.c.h.b16 %v452
        %v618 = vunpack.c.l.b16 %v453
        %v619 = vunpack.c.h.b16 %v453
        %v620 = vunpack.c.l.b16 %v454
        %v621 = vunpack.c.h.b16 %v454
        %v622 = vunpack.c.l.b16 %v455
        %v623 = vunpack.c.h.b16 %v455
        %v624 = vunpack.c.l.b16 %v456
        %v625 = vunpack.c.h.b16 %v456
        %v626 = vunpack.c.l.b16 %v457
        %v627 = vunpack.c.h.b16 %v457
        %v628 = vunpack.c.l.b16 %v458
        %v629 = vunpack.c.h.b16 %v458
        %v630 = vunpack.c.l.b16 %v459
        %v631 = vunpack.c.h.b16 %v459
        %v632 = vunpack.c.l.b16 %v460
        %v633 = vunpack.c.h.b16 %v460
        %v634 = vunpack.c.l.b16 %v461
        %v635 = vunpack.c.h.b16 %v461
        %v636 = vunpack.c.l.b16 %v462
        %v637 = vunpack.c.h.b16 %v462
        %v638 = vunpack.c.l.b16 %v463
        %v639 = vunpack.c.h.b16 %v463
        %v640 = vunpack.c.l.b16 %v464
        %v641 = vunpack.c.h.b16 %v464
        %v642 = vunpack.c.l.b16 %v465
        %v643 = vunpack.c.h.b16 %v465
        %v644 = vunpack.c.l.b16 %v466
        %v645 = vunpack.c.h.b16 %v466
        %v646 = vunpack.c.l.b16 %v467
        %v647 = vunpack.c.h.b16 %v467
        %v648 = vunpack.c.l.b16 %v468
        %v649 = vunpack.c.h.b16 %v468
        %v650 = vunpack.c.l.b16 %v469
        %v651 = vunpack.c.h.b16 %v469
        %v652 = vunpack.c.l.b16 %v470
        %v653 = vunpack.c.h.b16 %v470
        %v654 = vunpack.c.l.b16 %v471
        %v655 = vunpack.c.h.b16 %v471
        %v656 = vunpack.c.l.b16 %v472
        %v657 = vunpack.c.h.b16 %v472
        %v658 = vunpack.c.l.b16 %v473
        %v659 = vunpack.c.h.b16 %v473
        %v660 = vunpack.c.l.b16 %v474
        %v661 = vunpack.c.h.b16 %v474
        %v662 = vunpack.c.l.b16 %v475
        %v663 = vunpack.c.h.b16 %v475
        %v664 = vunpack.c.l.b16 %v476
        %v665 = vunpack.c.h.b16 %v476
        %v666 = vunpack.c.l.b16 %v477
        %v667 = vunpack.c.h.b16 %v477
        %v668 = vunpack.c.l.b16 %v478
        %v669 = vunpack.c.h.b16 %v478
        %v670 = vunpack.c.l.b16 %v479
        %v671 = vunpack.c.h.b16 %v479
        %v672 = vunpack.c.l.b16 %v480
        %v673 = vunpack.c.h.b16 %v480
        %v674 = vunpack.c.l.b16 %v481
        %v675 = vunpack.c.h.b16 %v481
        %v676 = vunpack.c.l.b16 %v482
        %v677 = vunpack.c.h.b16 %v482
        %v678 = vunpack.c.l.b16 %v483
        %v679 = vunpack.c.h.b16 %v483
        %v680 = vunpack.c.l.b16 %v484
        %v681 = vunpack.c.h.b16 %v484
        %v682 = vunpack.c.l.b16 %v485
        %v683 = vunpack.c.h.b16 %v485
        %v684 = vunpack.c.l.b16 %v486
        %v685 = vunpack.c.h.b16 %v486
        %v686 = vunpack.c.l.b16 %v487
        %v687 = vunpack.c.h.b16 %v487
        %v688 = vunpack.c.l.b16 %v488
        %v689 = vunpack.c.h.b16 %v488
        %v690 = vunpack.c.l.b16 %v489
        %v691 = vunpack.c.h.b16 %v489
        %v692 = vunpack.c.l.b16 %v490
        %v693 = vunpack.c.h.b16 %v490
        %v694 = vunpack.c.l.b16 %v491
        %v695 = vunpack.c.h.b16 %v491
        %v696 = vunpack.c.l.b16 %v492
        %v697 = vunpack.c.h.b16 %v492
        %v698 = vunpack.c.l.b16 %v493
        %v699 = vunpack.c.h.b16 %v493
        %v700 = vunpack.c.l.b16 %v494
        %v701 = vunpack.c.h.b16 %v494
        %v702 = vunpack.c.l.b16 %v495
        %v703 = vunpack.c.h.b16 %v495
        %v704 = vunpack.c.l.b16 %v496
        %v705 = vunpack.c.h.b16 %v496
        %v706 = vunpack.c.l.b16 %v497
        %v707 = vunpack.c.h.b16 %v497
        %v708 = vunpack.c.l.b16 %v498
        %v709 = vunpack.c.h.b16 %v498
        %v710 = vunpack.c.l.b16 %v499
        %v711 = vunpack.c.h.b16 %v499
        %v712 = vunpack.c.l.b16 %v500
        %v713 = vunpack.c.h.b16 %v500
        %v714 = vunpack.c.l.b16 %v501
        %v715 = vunpack.c.h.b16 %v501
        %v716 = vpack.c.b16 %v592, %v588
        %v717 = vpack.c.b16 %v593, %v589
        %v718 = vpack.c.b16 %v594, %v590
        %v719 = vpack.c.b16 %v595, %v591
        %v720 = vpack.c.b16 %v600, %v596
        %v721 = vpack.c.b16 %v601, %v597
        %v722 = vpack.c.b16 %v602, %v598
        %v723 = vpack.c.b16 %v603, %v599
        %v724 = vpack.c.b16 %v608, %v604
        %v725 = vpack.c.b16 %v609, %v605
        %v726 = vpack.c.b16 %v610, %v606
        %v727 = vpack.c.b16 %v611, %v607
        %v728 = vpack.c.b16 %v616, %v612
        %v729 = vpack.c.b16 %v617, %v613
        %v730 = vpack.c.b16 %v618, %v614
        %v731 = vpack.c.b16 %v619, %v615
        %v732 = vpack.c.b16 %v624, %v620
        %v733 = vpack.c.b16 %v625, %v621
        %v734 = vpack.c.b16 %v626, %v622
        %v735 = vpack.c.b16 %v627, %v623
        %v736 = vpack.c.b16 %v632, %v628
        %v737 = vpack.c.b16 %v633, %v629
        %v738 = vpack.c.b16 %v634, %v630
        %v739 = vpack.c.b16 %v635, %v631
        %v740 = vpack.c.b16 %v640, %v636
        %v741 = vpack.c.b16 %v641, %v637
        %v742 = vpack.c.b16 %v642, %v638
        %v743 = vpack.c.b16 %v643, %v639
        %v744 = vpack.c.b16 %v648, %v644
        %v745 = vpack.c.b16 %v649, %v645
        %v746 = vpack.c.b16 %v650, %v646
        %v747 = vpack.c.b16 %v651, %v647
        %v748 = vpack.c.b16 %v656, %v652
        %v749 = vpack.c.b16 %v657, %v653
        %v750 = vpack.c.b16 %v658, %v654
        %v751 = vpack.c.b16 %v659, %v655
        %v752 = vpack.c.b16 %v664, %v660
        %v753 = vpack.c.b16 %v665, %v661
        %v754 = vpack.c.b16 %v666, %v662
        %v755 = vpack.c.b16 %v667, %v663
        %v756 = vpack.c.b16 %v672, %v668
        %v757 = vpack.c.b16 %v673, %v669
        %v758 = vpack.c.b16 %v674, %v670
        %v759 = vpack.c.b16 %v675, %v671
        %v760 = vpack.c.b16 %v680, %v676
        %v761 = vpack.c.b16 %v681, %v677
        %v762 = vpack.c.b16 %v682, %v678
        %v763 = vpack.c.b16 %v683, %v679
        %v764 = vpack.c.b16 %v688, %v684
        %v765 = vpack.c.b16 %v689, %v685
        %v766 = vpack.c.b16 %v690, %v686
        %v767 = vpack.c.b16 %v691, %v687
        %v768 = vpack.c.b16 %v696, %v692
        %v769 = vpack.c.b16 %v697, %v693
        %v770 = vpack.c.b16 %v698, %v694
        %v771 = vpack.c.b16 %v699, %v695
        %v772 = vpack.c.b16 %v704, %v700
        %v773 = vpack.c.b16 %v705, %v701
        %v774 = vpack.c.b16 %v706, %v702
        %v775 = vpack.c.b16 %v707, %v703
        %v776 = vpack.c.b16 %v712, %v708
        %v777 = vpack.c.b16 %v713, %v709
        %v778 = vpack.c.b16 %v714, %v710
        %v779 = vpack.c.b16 %v715, %v711
        %844 = vmatprep.subr.bf16.mxu0 %v717
        %845 = vmatpush1.bf16.msra.mxu0 %v716
        %846 = vmatprep.subr.bf16.mxu0 %v721
        %847 = vmatpush1.bf16.msra.mxu0 %v720
        %848 = vmatprep.subr.bf16.mxu0 %v725
        %849 = vmatpush1.bf16.msra.mxu0 %v724
        %850 = vmatprep.subr.bf16.mxu0 %v729
        %851 = vmatpush1.bf16.msra.mxu0 %v728
        %852 = vmatprep.subr.bf16.mxu0 %v733
        %853 = vmatpush1.bf16.msra.mxu0 %v732
        %854 = vmatprep.subr.bf16.mxu0 %v737
        %855 = vmatpush1.bf16.msra.mxu0 %v736
        %856 = vmatprep.subr.bf16.mxu0 %v741
        %857 = vmatpush1.bf16.msra.mxu0 %v740
        %858 = vmatprep.subr.bf16.mxu0 %v745
        %859 = vmatpush1.bf16.msra.mxu0 %v744
        %860 = vmatprep.subr.bf16.mxu0 %v749
        %861 = vmatpush1.bf16.msra.mxu0 %v748
        %862 = vmatprep.subr.bf16.mxu0 %v753
        %863 = vmatpush1.bf16.msra.mxu0 %v752
        %864 = vmatprep.subr.bf16.mxu0 %v757
        %865 = vmatpush1.bf16.msra.mxu0 %v756
        %866 = vmatprep.subr.bf16.mxu0 %v761
        %867 = vmatpush1.bf16.msra.mxu0 %v760
        %868 = vmatprep.subr.bf16.mxu0 %v765
        %869 = vmatpush1.bf16.msra.mxu0 %v764
        %870 = vmatprep.subr.bf16.mxu0 %v769
        %871 = vmatpush1.bf16.msra.mxu0 %v768
        %872 = vmatprep.subr.bf16.mxu0 %v773
        %873 = vmatpush1.bf16.msra.mxu0 %v772
        %874 = vmatprep.subr.bf16.mxu0 %v777
        %875 = vmatpush1.bf16.msra.mxu0 %v776
        %876 = vmatprep.mubr.bf16.mxu0 %v521
        %877 = vmatmul.mubr.bf16.gmra.mrb[0].mxu0 %v520
        %v878 = vpop.f32.mrb[0].mxu0
        %v879 = vadd.f32 %v507, %v878
        %v880 = vpop.f32.mrb[0].mxu0
        %v881 = vadd.f32 %v507, %v880
        %v882 = vpop.f32.mrb[0].mxu0
        %v883 = vadd.f32 %v512, %v882
        %v884 = vpop.f32.mrb[0].mxu0
        %v885 = vadd.f32 %v512, %v884
        %886 = vdwg.mxu0
        %887 = vmatprep.subr.bf16.mxu0 %v719
        %888 = vmatpush1.bf16.msra.mxu0 %v718
        %889 = vmatprep.subr.bf16.mxu0 %v723
        %890 = vmatpush1.bf16.msra.mxu0 %v722
        %891 = vmatprep.subr.bf16.mxu0 %v727
        %892 = vmatpush1.bf16.msra.mxu0 %v726
        %893 = vmatprep.subr.bf16.mxu0 %v731
        %894 = vmatpush1.bf16.msra.mxu0 %v730
        %895 = vmatprep.subr.bf16.mxu0 %v735
        %896 = vmatpush1.bf16.msra.mxu0 %v734
        %897 = vmatprep.subr.bf16.mxu0 %v739
        %898 = vmatpush1.bf16.msra.mxu0 %v738
        %899 = vmatprep.subr.bf16.mxu0 %v743
        %900 = vmatpush1.bf16.msra.mxu0 %v742
        %901 = vmatprep.subr.bf16.mxu0 %v747
        %902 = vmatpush1.bf16.msra.mxu0 %v746
        %903 = vmatprep.subr.bf16.mxu0 %v751
        %904 = vmatpush1.bf16.msra.mxu0 %v750
        %905 = vmatprep.subr.bf16.mxu0 %v755
        %906 = vmatpush1.bf16.msra.mxu0 %v754
        %907 = vmatprep.subr.bf16.mxu0 %v759
        %908 = vmatpush1.bf16.msra.mxu0 %v758
        %909 = vmatprep.subr.bf16.mxu0 %v763
        %910 = vmatpush1.bf16.msra.mxu0 %v762
        %911 = vmatprep.subr.bf16.mxu0 %v767
        %912 = vmatpush1.bf16.msra.mxu0 %v766
        %913 = vmatprep.subr.bf16.mxu0 %v771
        %914 = vmatpush1.bf16.msra.mxu0 %v770
        %915 = vmatprep.subr.bf16.mxu0 %v775
        %916 = vmatpush1.bf16.msra.mxu0 %v774
        %917 = vmatprep.subr.bf16.mxu0 %v779
        %918 = vmatpush1.bf16.msra.mxu0 %v778
        %919 = vmatprep.mubr.bf16.mxu0 %v521
        %920 = vmatmul.mubr.bf16.gmra.mrb[0].mxu0 %v520
        %v921 = vpop.f32.mrb[0].mxu0
        %v922 = vadd.f32 %v507, %v921
        %v923 = vpop.f32.mrb[0].mxu0
        %v924 = vadd.f32 %v507, %v923
        %v925 = vpop.f32.mrb[0].mxu0
        %v926 = vadd.f32 %v512, %v925
        %v927 = vpop.f32.mrb[0].mxu0
        %v928 = vadd.f32 %v512, %v927
        %929 = vdwg.mxu0
        %v930 = vmax.f32 %v879, 0.0
        %v931 = vmax.f32 %v881, 0.0
        %v932 = vmax.f32 %v922, 0.0
        %v933 = vmax.f32 %v924, 0.0
        %v934 = vmax.f32 %v883, 0.0
        %v935 = vmax.f32 %v885, 0.0
        %v936 = vmax.f32 %v926, 0.0
        %v937 = vmax.f32 %v928, 0.0
        %v938 = vld [vmem:[%s4] sm:$0xff]
        %v939 = vld [vmem:[%s4 + $0x8] sm:$0xff]
        %v940 = vld [vmem:[%s4 + $0x10] sm:$0xff]
        %v941 = vld [vmem:[%s4 + $0x18] sm:$0xff]
        %v942 = vpack.c.bf16 %v939, %v938
        %v943 = vpack.c.bf16 %v941, %v940
        %v944 = vpack.c.bf16 %v934, %v930
        %v945 = vpack.c.bf16 %v935, %v931
        %v946 = vpack.c.bf16 %v936, %v932
        %v947 = vpack.c.bf16 %v937, %v933
        %v948 = vld [vmem:[%s5] sm:$0xff]
        %v949 = vld [vmem:[%s5 + $0x8] sm:$0xff]
        %v950 = vld [vmem:[%s5 + $0x10] sm:$0xff]
        %v951 = vld [vmem:[%s5 + $0x18] sm:$0xff]
        %953 = vset.pattern.permute.xlu0 0
        %954 = vperm.xlu0 %953, %v948
        %v955 = vpop.permute.xlu0 %954
        %958 = vset.pattern.permute.xlu0 0
        %959 = vperm.xlu0 %958, %v949
        %v960 = vpop.permute.xlu0 %959
        %963 = vset.pattern.permute.xlu0 0
        %964 = vperm.xlu0 %963, %v950
        %v965 = vpop.permute.xlu0 %964
        %968 = vset.pattern.permute.xlu0 0
        %969 = vperm.xlu0 %968, %v951
        %v970 = vpop.permute.xlu0 %969
        %vm972 = vcmask 130048
        %v974 = vsel %vm972, %v942, 0
        %v977 = vsel %vm972, %v943, 0
        %979 = vmatprep.subr.bf16.mxu0 %v945
        %980 = vmatpush1.bf16.msra.mxu0 %v944
        %981 = vmatprep.subr.bf16.mxu0 0
        %982 = vmatpush1.bf16.msra.mxu0 0
        %983 = vmatprep.subr.bf16.mxu0 0
        %984 = vmatpush1.bf16.msra.mxu0 0
        %985 = vmatprep.subr.bf16.mxu0 0
        %986 = vmatpush1.bf16.msra.mxu0 0
        %987 = vmatprep.subr.bf16.mxu0 0
        %988 = vmatpush1.bf16.msra.mxu0 0
        %989 = vmatprep.subr.bf16.mxu0 0
        %990 = vmatpush1.bf16.msra.mxu0 0
        %991 = vmatprep.subr.bf16.mxu0 0
        %992 = vmatpush1.bf16.msra.mxu0 0
        %993 = vmatprep.subr.bf16.mxu0 0
        %994 = vmatpush1.bf16.msra.mxu0 0
        %995 = vmatprep.subr.bf16.mxu0 0
        %996 = vmatpush1.bf16.msra.mxu0 0
        %997 = vmatprep.subr.bf16.mxu0 0
        %998 = vmatpush1.bf16.msra.mxu0 0
        %999 = vmatprep.subr.bf16.mxu0 0
        %1000 = vmatpush1.bf16.msra.mxu0 0
        %1001 = vmatprep.subr.bf16.mxu0 0
        %1002 = vmatpush1.bf16.msra.mxu0 0
        %1003 = vmatprep.subr.bf16.mxu0 0
        %1004 = vmatpush1.bf16.msra.mxu0 0
        %1005 = vmatprep.subr.bf16.mxu0 0
        %1006 = vmatpush1.bf16.msra.mxu0 0
        %1007 = vmatprep.subr.bf16.mxu0 0
        %1008 = vmatpush1.bf16.msra.mxu0 0
        %1009 = vmatprep.subr.bf16.mxu0 0
        %1010 = vmatpush1.bf16.msra.mxu0 0
        %1011 = vmatprep.mubr.bf16.mxu0 0
        %1012 = vmatmul.mubr.bf16.gmra.mrb[0].mxu0 %v974
        %v1013 = vpop.f32.mrb[0].mxu0
        %v1014 = vadd.f32 %v955, %v1013
        %v1015 = vpop.f32.mrb[0].mxu0
        %v1016 = vadd.f32 %v955, %v1015
        %v1017 = vpop.f32.mrb[0].mxu0
        %v1018 = vadd.f32 %v960, %v1017
        %v1019 = vpop.f32.mrb[0].mxu0
        %v1020 = vadd.f32 %v960, %v1019
        %1021 = vmatprep.mubr.bf16.mxu0 0
        %1022 = vmatmul.mubr.bf16.gmra.mrb[0].mxu0 %v977
        %v1023 = vpop.f32.mrb[0].mxu0
        %v1024 = vadd.f32 %v965, %v1023
        %v1025 = vpop.f32.mrb[0].mxu0
        %v1026 = vadd.f32 %v965, %v1025
        %v1027 = vpop.f32.mrb[0].mxu0
        %v1028 = vadd.f32 %v970, %v1027
        %v1029 = vpop.f32.mrb[0].mxu0
        %v1030 = vadd.f32 %v970, %v1029
        %1031 = vdwg.mxu0
        %1032 = vmatprep.subr.bf16.mxu0 %v947
        %1033 = vmatpush1.bf16.msra.mxu0 %v946
        %1034 = vmatprep.subr.bf16.mxu0 0
        %1035 = vmatpush1.bf16.msra.mxu0 0
        %1036 = vmatprep.subr.bf16.mxu0 0
        %1037 = vmatpush1.bf16.msra.mxu0 0
        %1038 = vmatprep.subr.bf16.mxu0 0
        %1039 = vmatpush1.bf16.msra.mxu0 0
        %1040 = vmatprep.subr.bf16.mxu0 0
        %1041 = vmatpush1.bf16.msra.mxu0 0
        %1042 = vmatprep.subr.bf16.mxu0 0
        %1043 = vmatpush1.bf16.msra.mxu0 0
        %1044 = vmatprep.subr.bf16.mxu0 0
        %1045 = vmatpush1.bf16.msra.mxu0 0
        %1046 = vmatprep.subr.bf16.mxu0 0
        %1047 = vmatpush1.bf16.msra.mxu0 0
        %1048 = vmatprep.subr.bf16.mxu0 0
        %1049 = vmatpush1.bf16.msra.mxu0 0
        %1050 = vmatprep.subr.bf16.mxu0 0
        %1051 = vmatpush1.bf16.msra.mxu0 0
        %1052 = vmatprep.subr.bf16.mxu0 0
        %1053 = vmatpush1.bf16.msra.mxu0 0
        %1054 = vmatprep.subr.bf16.mxu0 0
        %1055 = vmatpush1.bf16.msra.mxu0 0
        %1056 = vmatprep.subr.bf16.mxu0 0
        %1057 = vmatpush1.bf16.msra.mxu0 0
        %1058 = vmatprep.subr.bf16.mxu0 0
        %1059 = vmatpush1.bf16.msra.mxu0 0
        %1060 = vmatprep.subr.bf16.mxu0 0
        %1061 = vmatpush1.bf16.msra.mxu0 0
        %1062 = vmatprep.subr.bf16.mxu0 0
        %1063 = vmatpush1.bf16.msra.mxu0 0
        %1064 = vmatprep.mubr.bf16.mxu0 0
        %1065 = vmatmul.mubr.bf16.gmra.mrb[0].mxu0 %v974
        %v1066 = vpop.f32.mrb[0].mxu0
        %v1067 = vadd.f32 %v955, %v1066
        %v1068 = vpop.f32.mrb[0].mxu0
        %v1069 = vadd.f32 %v955, %v1068
        %v1070 = vpop.f32.mrb[0].mxu0
        %v1071 = vadd.f32 %v960, %v1070
        %v1072 = vpop.f32.mrb[0].mxu0
        %v1073 = vadd.f32 %v960, %v1072
        %1074 = vmatprep.mubr.bf16.mxu0 0
        %1075 = vmatmul.mubr.bf16.gmra.mrb[0].mxu0 %v977
        %v1076 = vpop.f32.mrb[0].mxu0
        %v1077 = vadd.f32 %v965, %v1076
        %v1078 = vpop.f32.mrb[0].mxu0
        %v1079 = vadd.f32 %v965, %v1078
        %v1080 = vpop.f32.mrb[0].mxu0
        %v1081 = vadd.f32 %v970, %v1080
        %v1082 = vpop.f32.mrb[0].mxu0
        %v1083 = vadd.f32 %v970, %v1082
        %1084 = vdwg.mxu0
        %1085 = vst [vmem:[%s425] sm:$0xff] %v1014
        %1086 = vst [vmem:[%s425 + $0x8] sm:$0xff] %v1016
        %1087 = vst [vmem:[%s425 + $0x10] sm:$0xff] %v1067
        %1088 = vst [vmem:[%s425 + $0x18] sm:$0xff] %v1069
        %1089 = vst [vmem:[%s425 + $0x20] sm:$0xff] %v1018
        %1090 = vst [vmem:[%s425 + $0x28] sm:$0xff] %v1020
        %1091 = vst [vmem:[%s425 + $0x30] sm:$0xff] %v1071
        %1092 = vst [vmem:[%s425 + $0x38] sm:$0xff] %v1073
        %1093 = vst [vmem:[%s425 + $0x40] sm:$0xff] %v1024
        %1094 = vst [vmem:[%s425 + $0x48] sm:$0xff] %v1026
        %1095 = vst [vmem:[%s425 + $0x50] sm:$0xff] %v1077
        %1096 = vst [vmem:[%s425 + $0x58] sm:$0xff] %v1079
        %1097 = vst [vmem:[%s425 + $0x60] sm:$0xff] %v1028
        %1098 = vst [vmem:[%s425 + $0x68] sm:$0xff] %v1030
        %1099 = vst [vmem:[%s425 + $0x70] sm:$0xff] %v1081
        %1100 = vst [vmem:[%s425 + $0x78] sm:$0xff] %v1083
        %v1101 = vadd.f32 %v930, %v931
        %v1102 = vadd.f32 %v1101, %v932
        %v1103 = vadd.f32 %v1102, %v933
        %1104 = vadd.xlane.f32.xlu0 %v1103
        %v1105 = vpop.xlane.xlu0 %1104
        %v1106 = vadd.f32 %v934, %v935
        %v1107 = vadd.f32 %v1106, %v936
        %v1108 = vadd.f32 %v1107, %v937
        %1109 = vadd.xlane.f32.xlu0 %v1108
        %v1110 = vpop.xlane.xlu0 %1109
        %v1111 = vmul.f32 %v1105, 0.001953125
        %v1112 = vmul.f32 %v1110, 0.001953125
        %v1113 = vld [vmem:[%s4] sm:$0xff]
        %v1114 = vld [vmem:[%s4 + $0x8] sm:$0xff]
        %v1115 = vld [vmem:[%s4 + $0x10] sm:$0xff]
        %v1116 = vld [vmem:[%s4 + $0x18] sm:$0xff]
        %v1117 = vld [vmem:[%s5] sm:$0xff]
        %v1118 = vld [vmem:[%s5 + $0x8] sm:$0xff]
        %v1119 = vld [vmem:[%s5 + $0x10] sm:$0xff]
        %v1120 = vld [vmem:[%s5 + $0x18] sm:$0xff]
        %v1122 = vsel %vm972, %v1113, 0
        %v1125 = vsel %vm972, %v1114, 0
        %v1128 = vsel %vm972, %v1115, 0
        %v1131 = vsel %vm972, %v1116, 0
        %1133 = vmatprep.subr.mxu0 0.0
        %1134 = vmatpush1.msra.mxu0 %v1111
        %1135 = vmatprep.subr.mxu0 0.0
        %1136 = vmatpush1.msra.mxu0 %v1112
        %1137 = vmatprep.subr.mxu0 0.0
        %1138 = vmatpush1.msra.mxu0 0.0
        %1139 = vmatprep.subr.mxu0 0.0
        %1140 = vmatpush1.msra.mxu0 0.0
        %1141 = vmatprep.subr.mxu0 0.0
        %1142 = vmatpush1.msra.mxu0 0.0
        %1143 = vmatprep.subr.mxu0 0.0
        %1144 = vmatpush1.msra.mxu0 0.0
        %1145 = vmatprep.subr.mxu0 0.0
        %1146 = vmatpush1.msra.mxu0 0.0
        %1147 = vmatprep.subr.mxu0 0.0
        %1148 = vmatpush1.msra.mxu0 0.0
        %1149 = vmatprep.subr.mxu0 0.0
        %1150 = vmatpush1.msra.mxu0 0.0
        %1151 = vmatprep.subr.mxu0 0.0
        %1152 = vmatpush1.msra.mxu0 0.0
        %1153 = vmatprep.subr.mxu0 0.0
        %1154 = vmatpush1.msra.mxu0 0.0
        %1155 = vmatprep.subr.mxu0 0.0
        %1156 = vmatpush1.msra.mxu0 0.0
        %1157 = vmatprep.subr.mxu0 0.0
        %1158 = vmatpush1.msra.mxu0 0.0
        %1159 = vmatprep.subr.mxu0 0.0
        %1160 = vmatpush1.msra.mxu0 0.0
        %1161 = vmatprep.subr.mxu0 0.0
        %1162 = vmatpush1.msra.mxu0 0.0
        %1163 = vmatprep.subr.mxu0 0.0
        %1164 = vmatpush1.msra.mxu0 0.0
        %1165 = vmatprep.subr.mxu0 0.0
        %1166 = vmatpush1.msra.mxu0 0.0
        %1167 = vmatprep.subr.mxu0 0.0
        %1168 = vmatpush1.msra.mxu0 0.0
        %1169 = vmatprep.subr.mxu0 0.0
        %1170 = vmatpush1.msra.mxu0 0.0
        %1171 = vmatprep.subr.mxu0 0.0
        %1172 = vmatpush1.msra.mxu0 0.0
        %1173 = vmatprep.subr.mxu0 0.0
        %1174 = vmatpush1.msra.mxu0 0.0
        %1175 = vmatprep.subr.mxu0 0.0
        %1176 = vmatpush1.msra.mxu0 0.0
        %1177 = vmatprep.subr.mxu0 0.0
        %1178 = vmatpush1.msra.mxu0 0.0
        %1179 = vmatprep.subr.mxu0 0.0
        %1180 = vmatpush1.msra.mxu0 0.0
        %1181 = vmatprep.subr.mxu0 0.0
        %1182 = vmatpush1.msra.mxu0 0.0
        %1183 = vmatprep.subr.mxu0 0.0
        %1184 = vmatpush1.msra.mxu0 0.0
        %1185 = vmatprep.subr.mxu0 0.0
        %1186 = vmatpush1.msra.mxu0 0.0
        %1187 = vmatprep.subr.mxu0 0.0
        %1188 = vmatpush1.msra.mxu0 0.0
        %1189 = vmatprep.subr.mxu0 0.0
        %1190 = vmatpush1.msra.mxu0 0.0
        %1191 = vmatprep.subr.mxu0 0.0
        %1192 = vmatpush1.msra.mxu0 0.0
        %1193 = vmatprep.subr.mxu0 0.0
        %1194 = vmatpush1.msra.mxu0 0.0
        %1195 = vmatprep.subr.mxu0 0.0
        %1196 = vmatpush1.msra.mxu0 0.0
        %1197 = vmatprep.mubr.f32.mxu0 0.0
        %1198 = vmatmul.mubr.f32.gmra.mrb[0].mxu0 %v1122
        %v1199 = vpop.f32.mrb[0].mxu0
        %v1200 = vadd.f32 %v1117, %v1199
        %v1201 = vpop.f32.mrb[0].mxu0
        %1202 = vmatprep.mubr.f32.mxu0 0.0
        %1203 = vmatmul.mubr.f32.gmra.mrb[0].mxu0 %v1125
        %v1204 = vpop.f32.mrb[0].mxu0
        %v1205 = vadd.f32 %v1118, %v1204
        %v1206 = vpop.f32.mrb[0].mxu0
        %1207 = vmatprep.mubr.f32.mxu0 0.0
        %1208 = vmatmul.mubr.f32.gmra.mrb[0].mxu0 %v1128
        %v1209 = vpop.f32.mrb[0].mxu0
        %v1210 = vadd.f32 %v1119, %v1209
        %v1211 = vpop.f32.mrb[0].mxu0
        %1212 = vmatprep.mubr.f32.mxu0 0.0
        %1213 = vmatmul.mubr.f32.gmra.mrb[0].mxu0 %v1131
        %v1214 = vpop.f32.mrb[0].mxu0
        %v1215 = vadd.f32 %v1120, %v1214
        %v1216 = vpop.f32.mrb[0].mxu0
        %1217 = vdwg.mxu0
        %v1218 = vld [vmem:[%s429] sm:$0x3f]
        %v1219 = vld [vmem:[%s6] sm:$0xff]
        %v1220 = vld [vmem:[%s6 + $0x8] sm:$0xff]
        %v1221 = vld [vmem:[%s6 + $0x10] sm:$0xff]
        %v1222 = vld [vmem:[%s6 + $0x18] sm:$0xff]
        %v1223 = vld [vmem:[%s7] sm:$0xff]
        %v1224 = vld [vmem:[%s7 + $0x8] sm:$0xff]
        %v1225 = vld [vmem:[%s7 + $0x10] sm:$0xff]
        %v1226 = vld [vmem:[%s7 + $0x18] sm:$0xff]
        %vm1227 = vcmask 48128
        %v1229 = vsel %vm1227, %v1219, 0
        %v1232 = vsel %vm1227, %v1220, 0
        %v1235 = vsel %vm1227, %v1221, 0
        %v1238 = vsel %vm1227, %v1222, 0
        %vm1240 = vcmask 1045504
        %v1242 = vsel %vm1240, %v1218, 0
        %1244 = vmatprep.subr.mxu0 0.0
        %1245 = vmatpush1.msra.mxu0 %v1242
        %1246 = vmatprep.subr.mxu0 0.0
        %1247 = vmatpush1.msra.mxu0 0.0
        %1248 = vmatprep.subr.mxu0 0.0
        %1249 = vmatpush1.msra.mxu0 0.0
        %1250 = vmatprep.subr.mxu0 0.0
        %1251 = vmatpush1.msra.mxu0 0.0
        %1252 = vmatprep.subr.mxu0 0.0
        %1253 = vmatpush1.msra.mxu0 0.0
        %1254 = vmatprep.subr.mxu0 0.0
        %1255 = vmatpush1.msra.mxu0 0.0
        %1256 = vmatprep.subr.mxu0 0.0
        %1257 = vmatpush1.msra.mxu0 0.0
        %1258 = vmatprep.subr.mxu0 0.0
        %1259 = vmatpush1.msra.mxu0 0.0
        %1260 = vmatprep.subr.mxu0 0.0
        %1261 = vmatpush1.msra.mxu0 0.0
        %1262 = vmatprep.subr.mxu0 0.0
        %1263 = vmatpush1.msra.mxu0 0.0
        %1264 = vmatprep.subr.mxu0 0.0
        %1265 = vmatpush1.msra.mxu0 0.0
        %1266 = vmatprep.subr.mxu0 0.0
        %1267 = vmatpush1.msra.mxu0 0.0
        %1268 = vmatprep.subr.mxu0 0.0
        %1269 = vmatpush1.msra.mxu0 0.0
        %1270 = vmatprep.subr.mxu0 0.0
        %1271 = vmatpush1.msra.mxu0 0.0
        %1272 = vmatprep.subr.mxu0 0.0
        %1273 = vmatpush1.msra.mxu0 0.0
        %1274 = vmatprep.subr.mxu0 0.0
        %1275 = vmatpush1.msra.mxu0 0.0
        %1276 = vmatprep.subr.mxu0 0.0
        %1277 = vmatpush1.msra.mxu0 0.0
        %1278 = vmatprep.subr.mxu0 0.0
        %1279 = vmatpush1.msra.mxu0 0.0
        %1280 = vmatprep.subr.mxu0 0.0
        %1281 = vmatpush1.msra.mxu0 0.0
        %1282 = vmatprep.subr.mxu0 0.0
        %1283 = vmatpush1.msra.mxu0 0.0
        %1284 = vmatprep.subr.mxu0 0.0
        %1285 = vmatpush1.msra.mxu0 0.0
        %1286 = vmatprep.subr.mxu0 0.0
        %1287 = vmatpush1.msra.mxu0 0.0
        %1288 = vmatprep.subr.mxu0 0.0
        %1289 = vmatpush1.msra.mxu0 0.0
        %1290 = vmatprep.subr.mxu0 0.0
        %1291 = vmatpush1.msra.mxu0 0.0
        %1292 = vmatprep.subr.mxu0 0.0
        %1293 = vmatpush1.msra.mxu0 0.0
        %1294 = vmatprep.subr.mxu0 0.0
        %1295 = vmatpush1.msra.mxu0 0.0
        %1296 = vmatprep.subr.mxu0 0.0
        %1297 = vmatpush1.msra.mxu0 0.0
        %1298 = vmatprep.subr.mxu0 0.0
        %1299 = vmatpush1.msra.mxu0 0.0
        %1300 = vmatprep.subr.mxu0 0.0
        %1301 = vmatpush1.msra.mxu0 0.0
        %1302 = vmatprep.subr.mxu0 0.0
        %1303 = vmatpush1.msra.mxu0 0.0
        %1304 = vmatprep.subr.mxu0 0.0
        %1305 = vmatpush1.msra.mxu0 0.0
        %1306 = vmatprep.subr.mxu0 0.0
        %1307 = vmatpush1.msra.mxu0 0.0
        %1308 = vmatprep.mubr.f32.mxu0 0.0
        %1309 = vmatmul.mubr.f32.gmra.mrb[0].mxu0 %v1229
        %v1310 = vpop.f32.mrb[0].mxu0
        %v1311 = vadd.f32 %v1223, %v1310
        %v1312 = vpop.f32.mrb[0].mxu0
        %1313 = vmatprep.mubr.f32.mxu0 0.0
        %1314 = vmatmul.mubr.f32.gmra.mrb[0].mxu0 %v1232
        %v1315 = vpop.f32.mrb[0].mxu0
        %v1316 = vadd.f32 %v1224, %v1315
        %v1317 = vpop.f32.mrb[0].mxu0
        %1318 = vmatprep.mubr.f32.mxu0 0.0
        %1319 = vmatmul.mubr.f32.gmra.mrb[0].mxu0 %v1235
        %v1320 = vpop.f32.mrb[0].mxu0
        %v1321 = vadd.f32 %v1225, %v1320
        %v1322 = vpop.f32.mrb[0].mxu0
        %1323 = vmatprep.mubr.f32.mxu0 0.0
        %1324 = vmatmul.mubr.f32.gmra.mrb[0].mxu0 %v1238
        %v1325 = vpop.f32.mrb[0].mxu0
        %v1326 = vadd.f32 %v1226, %v1325
        %v1327 = vpop.f32.mrb[0].mxu0
        %1328 = vdwg.mxu0
        %v1329 = vmax.f32 %v1311, 0.0
        %v1330 = vmax.f32 %v1316, 0.0
        %v1331 = vmax.f32 %v1321, 0.0
        %v1332 = vmax.f32 %v1326, 0.0
        %v1333 = vld [vmem:[%s8] sm:$0xff]
        %v1334 = vld [vmem:[%s8 + $0x8] sm:$0xff]
        %v1335 = vld [vmem:[%s8 + $0x10] sm:$0xff]
        %v1336 = vld [vmem:[%s8 + $0x18] sm:$0xff]
        %v1337 = vld [vmem:[%s9] sm:$0xff]
        %v1338 = vld [vmem:[%s9 + $0x8] sm:$0xff]
        %v1339 = vld [vmem:[%s9 + $0x10] sm:$0xff]
        %v1340 = vld [vmem:[%s9 + $0x18] sm:$0xff]
        %vm1341 = vcmask 261120
        %v1343 = vsel %vm1341, %v1333, 0
        %v1346 = vsel %vm1341, %v1334, 0
        %v1349 = vsel %vm1341, %v1335, 0
        %v1352 = vsel %vm1341, %v1336, 0
        %1354 = vmatprep.subr.mxu0 0.0
        %1355 = vmatpush1.msra.mxu0 %v1329
        %1356 = vmatprep.subr.mxu0 0.0
        %1357 = vmatpush1.msra.mxu0 %v1330
        %1358 = vmatprep.subr.mxu0 0.0
        %1359 = vmatpush1.msra.mxu0 %v1331
        %1360 = vmatprep.subr.mxu0 0.0
        %1361 = vmatpush1.msra.mxu0 %v1332
        %1362 = vmatprep.subr.mxu0 0.0
        %1363 = vmatpush1.msra.mxu0 0.0
        %1364 = vmatprep.subr.mxu0 0.0
        %1365 = vmatpush1.msra.mxu0 0.0
        %1366 = vmatprep.subr.mxu0 0.0
        %1367 = vmatpush1.msra.mxu0 0.0
        %1368 = vmatprep.subr.mxu0 0.0
        %1369 = vmatpush1.msra.mxu0 0.0
        %1370 = vmatprep.subr.mxu0 0.0
        %1371 = vmatpush1.msra.mxu0 0.0
        %1372 = vmatprep.subr.mxu0 0.0
        %1373 = vmatpush1.msra.mxu0 0.0
        %1374 = vmatprep.subr.mxu0 0.0
        %1375 = vmatpush1.msra.mxu0 0.0
        %1376 = vmatprep.subr.mxu0 0.0
        %1377 = vmatpush1.msra.mxu0 0.0
        %1378 = vmatprep.subr.mxu0 0.0
        %1379 = vmatpush1.msra.mxu0 0.0
        %1380 = vmatprep.subr.mxu0 0.0
        %1381 = vmatpush1.msra.mxu0 0.0
        %1382 = vmatprep.subr.mxu0 0.0
        %1383 = vmatpush1.msra.mxu0 0.0
        %1384 = vmatprep.subr.mxu0 0.0
        %1385 = vmatpush1.msra.mxu0 0.0
        %1386 = vmatprep.subr.mxu0 0.0
        %1387 = vmatpush1.msra.mxu0 0.0
        %1388 = vmatprep.subr.mxu0 0.0
        %1389 = vmatpush1.msra.mxu0 0.0
        %1390 = vmatprep.subr.mxu0 0.0
        %1391 = vmatpush1.msra.mxu0 0.0
        %1392 = vmatprep.subr.mxu0 0.0
        %1393 = vmatpush1.msra.mxu0 0.0
        %1394 = vmatprep.subr.mxu0 0.0
        %1395 = vmatpush1.msra.mxu0 0.0
        %1396 = vmatprep.subr.mxu0 0.0
        %1397 = vmatpush1.msra.mxu0 0.0
        %1398 = vmatprep.subr.mxu0 0.0
        %1399 = vmatpush1.msra.mxu0 0.0
        %1400 = vmatprep.subr.mxu0 0.0
        %1401 = vmatpush1.msra.mxu0 0.0
        %1402 = vmatprep.subr.mxu0 0.0
        %1403 = vmatpush1.msra.mxu0 0.0
        %1404 = vmatprep.subr.mxu0 0.0
        %1405 = vmatpush1.msra.mxu0 0.0
        %1406 = vmatprep.subr.mxu0 0.0
        %1407 = vmatpush1.msra.mxu0 0.0
        %1408 = vmatprep.subr.mxu0 0.0
        %1409 = vmatpush1.msra.mxu0 0.0
        %1410 = vmatprep.subr.mxu0 0.0
        %1411 = vmatpush1.msra.mxu0 0.0
        %1412 = vmatprep.subr.mxu0 0.0
        %1413 = vmatpush1.msra.mxu0 0.0
        %1414 = vmatprep.subr.mxu0 0.0
        %1415 = vmatpush1.msra.mxu0 0.0
        %1416 = vmatprep.subr.mxu0 0.0
        %1417 = vmatpush1.msra.mxu0 0.0
        %1418 = vmatprep.mubr.f32.mxu0 0.0
        %1419 = vmatmul.mubr.f32.gmra.mrb[0].mxu0 %v1343
        %v1420 = vpop.f32.mrb[0].mxu0
        %v1421 = vadd.f32 %v1337, %v1420
        %v1422 = vpop.f32.mrb[0].mxu0
        %1423 = vmatprep.mubr.f32.mxu0 0.0
        %1424 = vmatmul.mubr.f32.gmra.mrb[0].mxu0 %v1346
        %v1425 = vpop.f32.mrb[0].mxu0
        %v1426 = vadd.f32 %v1338, %v1425
        %v1427 = vpop.f32.mrb[0].mxu0
        %1428 = vmatprep.mubr.f32.mxu0 0.0
        %1429 = vmatmul.mubr.f32.gmra.mrb[0].mxu0 %v1349
        %v1430 = vpop.f32.mrb[0].mxu0
        %v1431 = vadd.f32 %v1339, %v1430
        %v1432 = vpop.f32.mrb[0].mxu0
        %1433 = vmatprep.mubr.f32.mxu0 0.0
        %1434 = vmatmul.mubr.f32.gmra.mrb[0].mxu0 %v1352
        %v1435 = vpop.f32.mrb[0].mxu0
        %v1436 = vadd.f32 %v1340, %v1435
        %v1437 = vpop.f32.mrb[0].mxu0
        %1438 = vdwg.mxu0
        %v1439 = vadd.f32 %v1421, %v1200
        %v1440 = vadd.f32 %v1426, %v1205
        %v1441 = vadd.f32 %v1431, %v1210
        %v1442 = vadd.f32 %v1436, %v1215
        %vm1443 = vcmask 7168
        %1444 = vst.msk [vmem:[%s434] sm:$0xff] %vm1443, %v1439
        %1445 = vst.msk [vmem:[%s434 + $0x8] sm:$0xff] %vm1443, %v1440
        %1446 = vst.msk [vmem:[%s434 + $0x10] sm:$0xff] %vm1443, %v1441
        %1447 = vst.msk [vmem:[%s434 + $0x18] sm:$0xff] %vm1443, %v1442
        %p1448 = scmp.lt.s32.totalorder %s29, 1
        %s1449 = scalar_select %p1448, %s29, 1
        %s1450 = smul.addr %s1449, 4
        %s1451 = smul.addr %s1450, 8
        %s1452 = scalar_lea.vmem %s10, %s1451
        %s1453 = sand.u32 %s283, 1
        %s1454 = scalar_lea.sflag [#allocation4], %s1453
        %s1455 = sand.u32 %s283, 1
        %s1456 = smul.addr %s1455, 128
        %s1457 = scalar_lea.vmem [#allocation5], %s1456
        // Predicated region
        $region65: #{tpu_custom_call.1} parent=59 // pred_check
          %p1458 = pneg %p267
        $region66: #{tpu_custom_call.1} parent=59 // pred_check_branch
          %1460 = sbr.rel (%p1458) target = $region68
        $region67: #{tpu_custom_call.1} parent=59 // pred_region
          _
        $region68: #{tpu_custom_call.1} parent=59 // pred_fallthru
          _
        // Predicated region
        $region69: #{tpu_custom_call.1} parent=59 // pred_check
          %p1461 = pneg %p293
        $region70: #{tpu_custom_call.1} parent=59 // pred_check_branch
          %1463 = sbr.rel (%p1461) target = $region72
        $region71: #{tpu_custom_call.1} parent=59 // pred_region
          %s1465 = ssub.s32 2048, 2048
          %1466 = vsyncadd %s1454, %s1465
          %s1467 = smul.addr %s29, 16
          %s1468 = smul.addr %s1467, 128
          %s1469 = scalar_lea.hbm %s11, %s1468
          %s1470 = sshll.u32 %s1457, 4
          %s1471 = int_to_ptr.vmem [resolvable:$true] %s1470
          %1476 = dma.vmem_to_hbm [thread:$0]  %s1471, 2048, %s1469, %s1454, 512, 512, 32
        $region72: #{tpu_custom_call.1} parent=59 // pred_fallthru
          _
      $region60: #{tpu_custom_call.1} parent=5 // pred_fallthru
        _
      %p1477 = scmp.le.s32.totalorder 2, %s24
      // Predicated region
      $region73: #{tpu_custom_call.1} parent=5 // pred_check
        %p1478 = pneg %p1477
      $region74: #{tpu_custom_call.1} parent=5 // pred_check_branch
        %1480 = sbr.rel (%p1478) target = $region76
      $region75: #{tpu_custom_call.1} parent=5 // pred_region
        %s1481 = ssub.s32 %s24, 2
        // Predicated region
        $region77: #{tpu_custom_call.1} parent=75 // pred_check
          %p1482 = pneg %p273
        $region78: #{tpu_custom_call.1} parent=75 // pred_check_branch
          %1484 = sbr.rel (%p1482) target = $region80
        $region79: #{tpu_custom_call.1} parent=75 // pred_region
          %p1485 = scmp.lt.s32.totalorder %s30, 1
          %s1486 = scalar_select %p1485, %s30, 1
          %s1487 = smul.addr %s1486, 4
          %s1488 = smul.addr %s1487, 8
          %s1489 = scalar_lea.vmem %s10, %s1488
        $region80: #{tpu_custom_call.1} parent=75 // pred_fallthru
          _
        // Predicated region
        $region81: #{tpu_custom_call.1} parent=75 // pred_check
          %p1490 = pneg %p299
        $region82: #{tpu_custom_call.1} parent=75 // pred_check_branch
          %1492 = sbr.rel (%p1490) target = $region84
        $region83: #{tpu_custom_call.1} parent=75 // pred_region
          %s1493 = sand.u32 %s284, 1
          %s1494 = scalar_lea.sflag [#allocation4], %s1493
          %s1495 = sand.u32 %s284, 1
          %s1496 = smul.addr %s1495, 128
          %s1497 = scalar_lea.vmem [#allocation5], %s1496
          %1498 = dma.done %s1494, 2048
        $region84: #{tpu_custom_call.1} parent=75 // pred_fallthru
          _
      $region76: #{tpu_custom_call.1} parent=5 // pred_fallthru
        _
    $region6: #{tpu_custom_call.1} parent=1 // loop_footer
      %s28 = sadd.s32 1, %s24
    $region7: #{tpu_custom_call.1} parent=1 // loop_footer_branch
      %23 = sbr.rel target = $region3
    $region8: #{tpu_custom_call.1} parent=1 // loop_exit
      _
    %1499 = vsyncpa [#allocation3], 1
    %s1500 = scalar_lea.sflag [#allocation3], 1
    %1501 = vsyncpa %s1500, 1
    %1502 = vsyncpa [#allocation4], 1
    %s1503 = scalar_lea.sflag [#allocation4], 1
    %1504 = vsyncpa %s1503, 1

</llo_original>
